<compile_context>
chip_gen: v5e
topology: v5e:2x2
jax: 0.10.0
libtpu: 0.0.40
codegen_flags: <defaults>
</compile_context>

<pallas_src>
import jax
import jax.numpy as jnp
from jax.experimental import pallas as pl
from jax.experimental.pallas import tpu as pltpu

# ----------------------------- config ---------------------------------------
VOCAB = 100
HIDDEN = 32
LAYERS = 2
HEADS = 4
HEAD_DIM = HIDDEN // HEADS
INTERMEDIATE = 64
MAX_POS = 16
TYPE_VOCAB = 2
LN_EPS = 1e-12

BATCH = 2
SEQ = 8


# ----------------------------- fused kernel ---------------------------------
def _layernorm(x, g, b):
    mean = jnp.mean(x, axis=-1, keepdims=True)
    var = jnp.mean((x - mean) ** 2, axis=-1, keepdims=True)
    inv = jax.lax.rsqrt(var + LN_EPS)
    return (x - mean) * inv * g + b


def _fused_bert_kernel(
    emb_ref, mask_ref,
    emb_ln_g_ref, emb_ln_b_ref,
    wqkv_ref, bqkv_ref,
    wo_ref, bo_ref, ln1_g_ref, ln1_b_ref,
    w1_ref, b1_ref, w2_ref, b2_ref, ln2_g_ref, ln2_b_ref,
    cls_w_ref, cls_b_ref,
    o_ref,
):
    """Single invocation: whole batch, full encoder + classifier in VMEM."""
    x = _layernorm(emb_ref[...], emb_ln_g_ref[...], emb_ln_b_ref[...])  # (M, H) f32
    mask = mask_ref[...]                               # (HEADS*M, HEADS*M) additive
    M = x.shape[0]                                     # = B*S (static)

    # LAYERS == 2, so a static unroll is fine; for deeper models switch to a
    # layer grid axis / lax.fori_loop with dynamic wqkv_ref[l] indexing.
    for l in range(LAYERS):
        # ---- fused QKV projection: (M, 3H), bf16 MXU, f32 accumulate ----
        # (1/sqrt(head_dim) is already folded into the Q columns of wqkv.)
        qkv = jnp.dot(x.astype(jnp.bfloat16), wqkv_ref[l],
                      preferred_element_type=jnp.float32) + bqkv_ref[l]

        # ---- stack heads along sublanes: (HEADS*M, HEAD_DIM) slabs --------
        def stack(base):
            return jnp.concatenate(
                [qkv[:, base + h * HEAD_DIM: base + (h + 1) * HEAD_DIM]
                 for h in range(HEADS)], axis=0)

        q = stack(0).astype(jnp.bfloat16)
        k = stack(HIDDEN).astype(jnp.bfloat16)
        v = stack(2 * HIDDEN).astype(jnp.bfloat16)

        # ---- ALL heads' attention in two MXU calls -------------------------
        # q @ k^T without materializing a transpose; block-diagonal mask
        # (heads x examples) + padding mask kills cross-block entries.
        s = jax.lax.dot_general(q, k, (((1,), (1,)), ((), ())),
                                preferred_element_type=jnp.float32)
        s = s + mask
        s = s - jnp.max(s, axis=-1, keepdims=True)
        p = jnp.exp(s)
        denom = jnp.sum(p, axis=-1, keepdims=True)
        p = p * pl.reciprocal(denom, approx=True)       # EUP slot, not VALU
        ctx = jnp.dot(p.astype(jnp.bfloat16), v,
                      preferred_element_type=jnp.float32)   # (HEADS*M, HEAD_DIM)

        # ---- merge heads back into lanes (registers only, no VMEM scratch) -
        ctx = jnp.concatenate([ctx[h * M:(h + 1) * M, :] for h in range(HEADS)],
                              axis=1)                        # (M, H)

        # ---- attention output projection + residual LayerNorm --------------
        attn_out = jnp.dot(ctx.astype(jnp.bfloat16), wo_ref[l],
                           preferred_element_type=jnp.float32) + bo_ref[l]
        x = _layernorm(attn_out + x, ln1_g_ref[l], ln1_b_ref[l])

        # ---- feed-forward (gelu) + residual LayerNorm -----------------------
        h1 = jnp.dot(x.astype(jnp.bfloat16), w1_ref[l],
                     preferred_element_type=jnp.float32) + b1_ref[l]
        # TODO(synk): HF BERT uses exact (erf) GELU; tanh approximation (~1e-3 dev) used here.
        h1 = jax.nn.gelu(h1, approximate=True)
        ff = jnp.dot(h1.astype(jnp.bfloat16), w2_ref[l],
                     preferred_element_type=jnp.float32) + b2_ref[l]
        x = _layernorm(ff + x, ln2_g_ref[l], ln2_b_ref[l])

    # ---- classifier head: (1,H) . (M,H)^T -> one lane-dense (1, M) row -----
    logits = jax.lax.dot_general(cls_w_ref[...], x.astype(jnp.bfloat16),
                                 (((1,), (1,)), ((), ())),
                                 preferred_element_type=jnp.float32) + cls_b_ref[...]
    o_ref[...] = jax.nn.sigmoid(logits).astype(o_ref.dtype)


# ----------------------------- parameters -----------------------------------
def init_params(key):
    def dense(k, fan_in, fan_out):
        return jax.random.normal(k, (fan_in, fan_out), jnp.float32) * 0.02

    scale = 1.0 / (HEAD_DIM ** 0.5)
    keys = jax.random.split(key, 4 + LAYERS)

    wqkv, bqkv, wo, bo = [], [], [], []
    ln1_g, ln1_b, w1, b1 = [], [], [], []
    w2, b2, ln2_g, ln2_b = [], [], [], []
    for l in range(LAYERS):
        lk = jax.random.split(keys[4 + l], 6)
        wq = dense(lk[0], HIDDEN, HIDDEN) * scale        # softmax scale folded in
        wk = dense(lk[1], HIDDEN, HIDDEN)
        wv = dense(lk[2], HIDDEN, HIDDEN)
        wqkv.append(jnp.concatenate([wq, wk, wv], axis=1).astype(jnp.bfloat16))
        bq = jnp.zeros((1, HIDDEN), jnp.float32) * scale  # Q bias pre-scaled too
        bqkv.append(jnp.concatenate(
            [bq, jnp.zeros((1, 2 * HIDDEN), jnp.float32)], axis=1))
        wo.append(dense(lk[3], HIDDEN, HIDDEN).astype(jnp.bfloat16))
        bo.append(jnp.zeros((1, HIDDEN), jnp.float32))
        ln1_g.append(jnp.ones((1, HIDDEN), jnp.float32))
        ln1_b.append(jnp.zeros((1, HIDDEN), jnp.float32))
        w1.append(dense(lk[4], HIDDEN, INTERMEDIATE).astype(jnp.bfloat16))
        b1.append(jnp.zeros((1, INTERMEDIATE), jnp.float32))
        w2.append(dense(lk[5], INTERMEDIATE, HIDDEN).astype(jnp.bfloat16))
        b2.append(jnp.zeros((1, HIDDEN), jnp.float32))
        ln2_g.append(jnp.ones((1, HIDDEN), jnp.float32))
        ln2_b.append(jnp.zeros((1, HIDDEN), jnp.float32))

    return {
        "word_emb": jax.random.normal(keys[0], (VOCAB, HIDDEN), jnp.float32) * 0.02,
        "pos_emb": jax.random.normal(keys[1], (MAX_POS, HIDDEN), jnp.float32) * 0.02,
        "type_emb": jax.random.normal(keys[2], (TYPE_VOCAB, HIDDEN), jnp.float32) * 0.02,
        "emb_ln_g": jnp.ones((1, HIDDEN), jnp.float32),
        "emb_ln_b": jnp.zeros((1, HIDDEN), jnp.float32),
        "cls_w": (jax.random.normal(keys[3], (1, HIDDEN), jnp.float32) * 0.02
                  ).astype(jnp.bfloat16),                 # row form of (H,1) weight
        "cls_b": jnp.zeros((1, 1), jnp.float32),
        "wqkv": jnp.stack(wqkv), "bqkv": jnp.stack(bqkv),
        "wo": jnp.stack(wo), "bo": jnp.stack(bo),
        "ln1_g": jnp.stack(ln1_g), "ln1_b": jnp.stack(ln1_b),
        "w1": jnp.stack(w1), "b1": jnp.stack(b1),
        "w2": jnp.stack(w2), "b2": jnp.stack(b2),
        "ln2_g": jnp.stack(ln2_g), "ln2_b": jnp.stack(ln2_b),
    }


# ----------------------------- mask construction ----------------------------
def _build_attention_mask(attention_mask, B, S):
    """Block-diagonal (HEADS*B*S, HEADS*B*S) additive mask.

    -10000 on cross-head entries, cross-example entries and padded key
    columns (BERT convention); 0 elsewhere.  Off-block scores underflow to
    exactly 0 after the softmax, so one big softmax equals per-(head,example)
    softmaxes."""
    M = B * S
    batch_of_tok = jnp.repeat(jnp.arange(B, dtype=jnp.int32), S)         # (M,)
    head_of_row = jnp.repeat(jnp.arange(HEADS, dtype=jnp.int32), M)      # (HM,)
    batch_of_row = jnp.tile(batch_of_tok, HEADS)                         # (HM,)
    key_valid = jnp.tile(attention_mask.reshape(M).astype(jnp.int32), HEADS)
    ok = ((head_of_row[:, None] == head_of_row[None, :])
          & (batch_of_row[:, None] == batch_of_row[None, :])
          & (key_valid[None, :] > 0))
    return jnp.where(ok, 0.0, -10000.0).astype(jnp.float32)


# ----------------------------- forward --------------------------------------
def bert_summarizer_forward(params, input_ids, attention_mask):
    B, S = input_ids.shape
    M = B * S

    # Embeddings (gather = plain-JAX glue feeding the fused kernel).
    # The reference module never passes token_type_ids, so HF BERT uses
    # all-zero segment ids -> only segment-0 type embedding is added.
    emb = (params["word_emb"][input_ids]
           + params["pos_emb"][:S][None, :, :]
           + params["type_emb"][0][None, None, :]).astype(jnp.float32)   # (B, S, H)
    emb_flat = emb.reshape(M, HIDDEN)

    mask_big = _build_attention_mask(attention_mask, B, S)   # (HEADS*M, HEADS*M)

    args = (
        emb_flat, mask_big,
        params["emb_ln_g"], params["emb_ln_b"],
        params["wqkv"], params["bqkv"],
        params["wo"], params["bo"], params["ln1_g"], params["ln1_b"],
        params["w1"], params["b1"], params["w2"], params["b2"],
        params["ln2_g"], params["ln2_b"],
        params["cls_w"], params["cls_b"],
    )

    def vmem_spec():
        return pl.BlockSpec(memory_space=pltpu.MemorySpace.VMEM)

    probs = pl.pallas_call(
        _fused_bert_kernel,
        out_shape=jax.ShapeDtypeStruct((1, M), jnp.float32),
        in_specs=[vmem_spec() for _ in args],
        out_specs=vmem_spec(),
    )(*args)
    return probs.reshape(B, S)   # sigmoid(logits).squeeze(-1)


# ----------------------------- main -----------------------------------------
if __name__ == "__main__":
    key = jax.random.PRNGKey(0)
    pkey, ikey = jax.random.split(key)

    params = init_params(pkey)

    input_ids = jax.random.randint(ikey, (BATCH, SEQ), 0, VOCAB, dtype=jnp.int32)
    attention_mask = jnp.ones((BATCH, SEQ), dtype=jnp.int32)
    attention_mask = attention_mask.at[1, SEQ - 2:].set(0)   # pad tail of 2nd example

    probs = bert_summarizer_forward(params, input_ids, attention_mask)
    probs = jax.block_until_ready(probs)

    assert probs.shape == (BATCH, SEQ)
    assert probs.dtype == jnp.float32
    assert bool(jnp.all((probs >= 0.0) & (probs <= 1.0)))
    print("KERNEL_OK")
</pallas_src>

<mosaic_0001>
module attributes {stable_mosaic.version = 11 : i64} {
  func.func @_fused_bert_kernel(%arg0: memref<16x32xf32, #tpu.memory_space<vmem>>, %arg1: memref<64x64xf32, #tpu.memory_space<vmem>>, %arg2: memref<1x32xf32, #tpu.memory_space<vmem>>, %arg3: memref<1x32xf32, #tpu.memory_space<vmem>>, %arg4: memref<2x32x96xbf16, #tpu.memory_space<vmem>>, %arg5: memref<2x1x96xf32, #tpu.memory_space<vmem>>, %arg6: memref<2x32x32xbf16, #tpu.memory_space<vmem>>, %arg7: memref<2x1x32xf32, #tpu.memory_space<vmem>>, %arg8: memref<2x1x32xf32, #tpu.memory_space<vmem>>, %arg9: memref<2x1x32xf32, #tpu.memory_space<vmem>>, %arg10: memref<2x32x64xbf16, #tpu.memory_space<vmem>>, %arg11: memref<2x1x64xf32, #tpu.memory_space<vmem>>, %arg12: memref<2x64x32xbf16, #tpu.memory_space<vmem>>, %arg13: memref<2x1x32xf32, #tpu.memory_space<vmem>>, %arg14: memref<2x1x32xf32, #tpu.memory_space<vmem>>, %arg15: memref<2x1x32xf32, #tpu.memory_space<vmem>>, %arg16: memref<1x32xbf16, #tpu.memory_space<vmem>>, %arg17: memref<1x1xf32, #tpu.memory_space<vmem>>, %arg18: memref<1x16xf32, #tpu.memory_space<vmem>>) attributes {dimension_semantics = [], scalar_prefetch = 0 : i64, scratch_operands = 0 : i64, tpu.core_type = #tpu.core_type<tc>} {
    %c0 = arith.constant 0 : index
    %c0_0 = arith.constant 0 : index
    %0 = vector.load %arg0[%c0, %c0_0] : memref<16x32xf32, #tpu.memory_space<vmem>>, vector<16x32xf32>
    %c0_1 = arith.constant 0 : index
    %c0_2 = arith.constant 0 : index
    %1 = vector.load %arg2[%c0_1, %c0_2] : memref<1x32xf32, #tpu.memory_space<vmem>>, vector<1x32xf32>
    %c0_3 = arith.constant 0 : index
    %c0_4 = arith.constant 0 : index
    %2 = vector.load %arg3[%c0_3, %c0_4] : memref<1x32xf32, #tpu.memory_space<vmem>>, vector<1x32xf32>
    %cst = arith.constant dense<0.000000e+00> : vector<16xf32>
    %3 = vector.multi_reduction <add>, %0, %cst [1] : vector<16x32xf32> to vector<16xf32>
    %4 = vector.shape_cast %3 : vector<16xf32> to vector<16x1xf32>
    %cst_5 = arith.constant 3.200000e+01 : f32
    %5 = vector.broadcast %cst_5 : f32 to vector<16x1xf32>
    %6 = arith.divf %4, %5 : vector<16x1xf32>
    %7 = vector.broadcast %6 : vector<16x1xf32> to vector<16x32xf32>
    %8 = arith.subf %0, %7 : vector<16x32xf32>
    %9 = arith.mulf %8, %8 : vector<16x32xf32>
    %cst_6 = arith.constant dense<0.000000e+00> : vector<16xf32>
    %10 = vector.multi_reduction <add>, %9, %cst_6 [1] : vector<16x32xf32> to vector<16xf32>
    %11 = vector.shape_cast %10 : vector<16xf32> to vector<16x1xf32>
    %cst_7 = arith.constant 3.200000e+01 : f32
    %12 = vector.broadcast %cst_7 : f32 to vector<16x1xf32>
    %13 = arith.divf %11, %12 : vector<16x1xf32>
    %cst_8 = arith.constant 9.99999996E-13 : f32
    %14 = vector.broadcast %cst_8 : f32 to vector<16x1xf32>
    %15 = arith.addf %13, %14 : vector<16x1xf32>
    %16 = math.rsqrt %15 : vector<16x1xf32>
    %17 = vector.broadcast %6 : vector<16x1xf32> to vector<16x32xf32>
    %18 = arith.subf %0, %17 : vector<16x32xf32>
    %19 = vector.broadcast %16 : vector<16x1xf32> to vector<16x32xf32>
    %20 = arith.mulf %18, %19 : vector<16x32xf32>
    %21 = vector.broadcast %1 : vector<1x32xf32> to vector<16x32xf32>
    %22 = arith.mulf %20, %21 : vector<16x32xf32>
    %23 = vector.broadcast %2 : vector<1x32xf32> to vector<16x32xf32>
    %24 = arith.addf %22, %23 : vector<16x32xf32>
    %c0_9 = arith.constant 0 : index
    %c0_10 = arith.constant 0 : index
    %25 = vector.load %arg1[%c0_9, %c0_10] : memref<64x64xf32, #tpu.memory_space<vmem>>, vector<64x64xf32>
    %26 = arith.truncf %24 : vector<16x32xf32> to vector<16x32xbf16>
    %c0_11 = arith.constant 0 : index
    %c0_12 = arith.constant 0 : index
    %c0_13 = arith.constant 0 : index
    %27 = vector.load %arg4[%c0_11, %c0_12, %c0_13] : memref<2x32x96xbf16, #tpu.memory_space<vmem>>, vector<1x32x96xbf16>
    %28 = vector.shape_cast %27 : vector<1x32x96xbf16> to vector<32x96xbf16>
    %cst_14 = arith.constant dense<0.000000e+00> : vector<16x96xf32>
    %29 = tpu.matmul %26, %28, %cst_14 {dimension_numbers = #tpu.dot_dimension_numbers<[1], [0], [0], [1], [0, 0, 1, 1], [], []>} : vector<16x32xbf16>, vector<32x96xbf16>, vector<16x96xf32> -> vector<16x96xf32>
    %c0_15 = arith.constant 0 : index
    %c0_16 = arith.constant 0 : index
    %c0_17 = arith.constant 0 : index
    %30 = vector.load %arg5[%c0_15, %c0_16, %c0_17] : memref<2x1x96xf32, #tpu.memory_space<vmem>>, vector<1x1x96xf32>
    %31 = vector.shape_cast %30 : vector<1x1x96xf32> to vector<1x96xf32>
    %32 = vector.broadcast %31 : vector<1x96xf32> to vector<16x96xf32>
    %33 = arith.addf %29, %32 : vector<16x96xf32>
    %34 = vector.extract_strided_slice %33 {offsets = [0, 0], sizes = [16, 8], strides = [1, 1]} : vector<16x96xf32> to vector<16x8xf32>
    %35 = vector.extract_strided_slice %33 {offsets = [0, 8], sizes = [16, 8], strides = [1, 1]} : vector<16x96xf32> to vector<16x8xf32>
    %36 = vector.extract_strided_slice %33 {offsets = [0, 16], sizes = [16, 8], strides = [1, 1]} : vector<16x96xf32> to vector<16x8xf32>
    %37 = vector.extract_strided_slice %33 {offsets = [0, 24], sizes = [16, 8], strides = [1, 1]} : vector<16x96xf32> to vector<16x8xf32>
    %38 = tpu.concatenate %34, %35, %36, %37 in 0 : vector<16x8xf32>, vector<16x8xf32>, vector<16x8xf32>, vector<16x8xf32> -> vector<64x8xf32>
    %39 = arith.truncf %38 : vector<64x8xf32> to vector<64x8xbf16>
    %40 = vector.extract_strided_slice %33 {offsets = [0, 32], sizes = [16, 8], strides = [1, 1]} : vector<16x96xf32> to vector<16x8xf32>
    %41 = vector.extract_strided_slice %33 {offsets = [0, 40], sizes = [16, 8], strides = [1, 1]} : vector<16x96xf32> to vector<16x8xf32>
    %42 = vector.extract_strided_slice %33 {offsets = [0, 48], sizes = [16, 8], strides = [1, 1]} : vector<16x96xf32> to vector<16x8xf32>
    %43 = vector.extract_strided_slice %33 {offsets = [0, 56], sizes = [16, 8], strides = [1, 1]} : vector<16x96xf32> to vector<16x8xf32>
    %44 = tpu.concatenate %40, %41, %42, %43 in 0 : vector<16x8xf32>, vector<16x8xf32>, vector<16x8xf32>, vector<16x8xf32> -> vector<64x8xf32>
    %45 = arith.truncf %44 : vector<64x8xf32> to vector<64x8xbf16>
    %46 = vector.extract_strided_slice %33 {offsets = [0, 64], sizes = [16, 8], strides = [1, 1]} : vector<16x96xf32> to vector<16x8xf32>
    %47 = vector.extract_strided_slice %33 {offsets = [0, 72], sizes = [16, 8], strides = [1, 1]} : vector<16x96xf32> to vector<16x8xf32>
    %48 = vector.extract_strided_slice %33 {offsets = [0, 80], sizes = [16, 8], strides = [1, 1]} : vector<16x96xf32> to vector<16x8xf32>
    %49 = vector.extract_strided_slice %33 {offsets = [0, 88], sizes = [16, 8], strides = [1, 1]} : vector<16x96xf32> to vector<16x8xf32>
    %50 = tpu.concatenate %46, %47, %48, %49 in 0 : vector<16x8xf32>, vector<16x8xf32>, vector<16x8xf32>, vector<16x8xf32> -> vector<64x8xf32>
    %51 = arith.truncf %50 : vector<64x8xf32> to vector<64x8xbf16>
    %cst_18 = arith.constant dense<0.000000e+00> : vector<64x64xf32>
    %52 = tpu.matmul %39, %45, %cst_18 {dimension_numbers = #tpu.dot_dimension_numbers<[1], [1], [0], [0], [0, 0, 1, 0], [], []>} : vector<64x8xbf16>, vector<64x8xbf16>, vector<64x64xf32> -> vector<64x64xf32>
    %53 = arith.addf %52, %25 : vector<64x64xf32>
    %cst_19 = arith.constant dense<0xFF800000> : vector<64xf32>
    %54 = vector.multi_reduction <maximumf>, %53, %cst_19 [1] : vector<64x64xf32> to vector<64xf32>
    %55 = vector.shape_cast %54 : vector<64xf32> to vector<64x1xf32>
    %56 = vector.broadcast %55 : vector<64x1xf32> to vector<64x64xf32>
    %57 = arith.subf %53, %56 : vector<64x64xf32>
    %58 = math.exp %57 : vector<64x64xf32>
    %cst_20 = arith.constant dense<0.000000e+00> : vector<64xf32>
    %59 = vector.multi_reduction <add>, %58, %cst_20 [1] : vector<64x64xf32> to vector<64xf32>
    %60 = vector.shape_cast %59 : vector<64xf32> to vector<64x1xf32>
    %61 = tpu.reciprocal %60 {approx = true} : vector<64x1xf32> -> vector<64x1xf32>
    %62 = vector.broadcast %61 : vector<64x1xf32> to vector<64x64xf32>
    %63 = arith.mulf %58, %62 : vector<64x64xf32>
    %64 = arith.truncf %63 : vector<64x64xf32> to vector<64x64xbf16>
    %cst_21 = arith.constant dense<0.000000e+00> : vector<64x8xf32>
    %65 = tpu.matmul %64, %51, %cst_21 {dimension_numbers = #tpu.dot_dimension_numbers<[1], [0], [0], [1], [0, 0, 1, 1], [], []>} : vector<64x64xbf16>, vector<64x8xbf16>, vector<64x8xf32> -> vector<64x8xf32>
    %66 = vector.extract_strided_slice %65 {offsets = [0, 0], sizes = [16, 8], strides = [1, 1]} : vector<64x8xf32> to vector<16x8xf32>
    %67 = vector.extract_strided_slice %65 {offsets = [16, 0], sizes = [16, 8], strides = [1, 1]} : vector<64x8xf32> to vector<16x8xf32>
    %68 = vector.extract_strided_slice %65 {offsets = [32, 0], sizes = [16, 8], strides = [1, 1]} : vector<64x8xf32> to vector<16x8xf32>
    %69 = vector.extract_strided_slice %65 {offsets = [48, 0], sizes = [16, 8], strides = [1, 1]} : vector<64x8xf32> to vector<16x8xf32>
    %70 = tpu.concatenate %66, %67, %68, %69 in 1 : vector<16x8xf32>, vector<16x8xf32>, vector<16x8xf32>, vector<16x8xf32> -> vector<16x32xf32>
    %71 = arith.truncf %70 : vector<16x32xf32> to vector<16x32xbf16>
    %c0_22 = arith.constant 0 : index
    %c0_23 = arith.constant 0 : index
    %c0_24 = arith.constant 0 : index
    %72 = vector.load %arg6[%c0_22, %c0_23, %c0_24] : memref<2x32x32xbf16, #tpu.memory_space<vmem>>, vector<1x32x32xbf16>
    %73 = vector.shape_cast %72 : vector<1x32x32xbf16> to vector<32x32xbf16>
    %cst_25 = arith.constant dense<0.000000e+00> : vector<16x32xf32>
    %74 = tpu.matmul %71, %73, %cst_25 {dimension_numbers = #tpu.dot_dimension_numbers<[1], [0], [0], [1], [0, 0, 1, 1], [], []>} : vector<16x32xbf16>, vector<32x32xbf16>, vector<16x32xf32> -> vector<16x32xf32>
    %c0_26 = arith.constant 0 : index
    %c0_27 = arith.constant 0 : index
    %c0_28 = arith.constant 0 : index
    %75 = vector.load %arg7[%c0_26, %c0_27, %c0_28] : memref<2x1x32xf32, #tpu.memory_space<vmem>>, vector<1x1x32xf32>
    %76 = vector.shape_cast %75 : vector<1x1x32xf32> to vector<1x32xf32>
    %77 = vector.broadcast %76 : vector<1x32xf32> to vector<16x32xf32>
    %78 = arith.addf %74, %77 : vector<16x32xf32>
    %79 = arith.addf %78, %24 : vector<16x32xf32>
    %c0_29 = arith.constant 0 : index
    %c0_30 = arith.constant 0 : index
    %c0_31 = arith.constant 0 : index
    %80 = vector.load %arg8[%c0_29, %c0_30, %c0_31] : memref<2x1x32xf32, #tpu.memory_space<vmem>>, vector<1x1x32xf32>
    %81 = vector.shape_cast %80 : vector<1x1x32xf32> to vector<1x32xf32>
    %c0_32 = arith.constant 0 : index
    %c0_33 = arith.constant 0 : index
    %c0_34 = arith.constant 0 : index
    %82 = vector.load %arg9[%c0_32, %c0_33, %c0_34] : memref<2x1x32xf32, #tpu.memory_space<vmem>>, vector<1x1x32xf32>
    %83 = vector.shape_cast %82 : vector<1x1x32xf32> to vector<1x32xf32>
    %cst_35 = arith.constant dense<0.000000e+00> : vector<16xf32>
    %84 = vector.multi_reduction <add>, %79, %cst_35 [1] : vector<16x32xf32> to vector<16xf32>
    %85 = vector.shape_cast %84 : vector<16xf32> to vector<16x1xf32>
    %cst_36 = arith.constant 3.200000e+01 : f32
    %86 = vector.broadcast %cst_36 : f32 to vector<16x1xf32>
    %87 = arith.divf %85, %86 : vector<16x1xf32>
    %88 = vector.broadcast %87 : vector<16x1xf32> to vector<16x32xf32>
    %89 = arith.subf %79, %88 : vector<16x32xf32>
    %90 = arith.mulf %89, %89 : vector<16x32xf32>
    %cst_37 = arith.constant dense<0.000000e+00> : vector<16xf32>
    %91 = vector.multi_reduction <add>, %90, %cst_37 [1] : vector<16x32xf32> to vector<16xf32>
    %92 = vector.shape_cast %91 : vector<16xf32> to vector<16x1xf32>
    %cst_38 = arith.constant 3.200000e+01 : f32
    %93 = vector.broadcast %cst_38 : f32 to vector<16x1xf32>
    %94 = arith.divf %92, %93 : vector<16x1xf32>
    %cst_39 = arith.constant 9.99999996E-13 : f32
    %95 = vector.broadcast %cst_39 : f32 to vector<16x1xf32>
    %96 = arith.addf %94, %95 : vector<16x1xf32>
    %97 = math.rsqrt %96 : vector<16x1xf32>
    %98 = vector.broadcast %87 : vector<16x1xf32> to vector<16x32xf32>
    %99 = arith.subf %79, %98 : vector<16x32xf32>
    %100 = vector.broadcast %97 : vector<16x1xf32> to vector<16x32xf32>
    %101 = arith.mulf %99, %100 : vector<16x32xf32>
    %102 = vector.broadcast %81 : vector<1x32xf32> to vector<16x32xf32>
    %103 = arith.mulf %101, %102 : vector<16x32xf32>
    %104 = vector.broadcast %83 : vector<1x32xf32> to vector<16x32xf32>
    %105 = arith.addf %103, %104 : vector<16x32xf32>
    %106 = arith.truncf %105 : vector<16x32xf32> to vector<16x32xbf16>
    %c0_40 = arith.constant 0 : index
    %c0_41 = arith.constant 0 : index
    %c0_42 = arith.constant 0 : index
    %107 = vector.load %arg10[%c0_40, %c0_41, %c0_42] : memref<2x32x64xbf16, #tpu.memory_space<vmem>>, vector<1x32x64xbf16>
    %108 = vector.shape_cast %107 : vector<1x32x64xbf16> to vector<32x64xbf16>
    %cst_43 = arith.constant dense<0.000000e+00> : vector<16x64xf32>
    %109 = tpu.matmul %106, %108, %cst_43 {dimension_numbers = #tpu.dot_dimension_numbers<[1], [0], [0], [1], [0, 0, 1, 1], [], []>} : vector<16x32xbf16>, vector<32x64xbf16>, vector<16x64xf32> -> vector<16x64xf32>
    %c0_44 = arith.constant 0 : index
    %c0_45 = arith.constant 0 : index
    %c0_46 = arith.constant 0 : index
    %110 = vector.load %arg11[%c0_44, %c0_45, %c0_46] : memref<2x1x64xf32, #tpu.memory_space<vmem>>, vector<1x1x64xf32>
    %111 = vector.shape_cast %110 : vector<1x1x64xf32> to vector<1x64xf32>
    %112 = vector.broadcast %111 : vector<1x64xf32> to vector<16x64xf32>
    %113 = arith.addf %109, %112 : vector<16x64xf32>
    %114 = arith.mulf %113, %113 : vector<16x64xf32>
    %115 = arith.mulf %113, %114 : vector<16x64xf32>
    %cst_47 = arith.constant 4.471500e-02 : f32
    %116 = vector.broadcast %cst_47 : f32 to vector<16x64xf32>
    %117 = arith.mulf %116, %115 : vector<16x64xf32>
    %118 = arith.addf %113, %117 : vector<16x64xf32>
    %cst_48 = arith.constant 0.797884583 : f32
    %119 = vector.broadcast %cst_48 : f32 to vector<16x64xf32>
    %120 = arith.mulf %119, %118 : vector<16x64xf32>
    %121 = math.tanh %120 : vector<16x64xf32>
    %cst_49 = arith.constant 1.000000e+00 : f32
    %122 = vector.broadcast %cst_49 : f32 to vector<16x64xf32>
    %123 = arith.addf %122, %121 : vector<16x64xf32>
    %cst_50 = arith.constant 5.000000e-01 : f32
    %124 = vector.broadcast %cst_50 : f32 to vector<16x64xf32>
    %125 = arith.mulf %124, %123 : vector<16x64xf32>
    %126 = arith.mulf %113, %125 : vector<16x64xf32>
    %127 = arith.truncf %126 : vector<16x64xf32> to vector<16x64xbf16>
    %c0_51 = arith.constant 0 : index
    %c0_52 = arith.constant 0 : index
    %c0_53 = arith.constant 0 : index
    %128 = vector.load %arg12[%c0_51, %c0_52, %c0_53] : memref<2x64x32xbf16, #tpu.memory_space<vmem>>, vector<1x64x32xbf16>
    %129 = vector.shape_cast %128 : vector<1x64x32xbf16> to vector<64x32xbf16>
    %cst_54 = arith.constant dense<0.000000e+00> : vector<16x32xf32>
    %130 = tpu.matmul %127, %129, %cst_54 {dimension_numbers = #tpu.dot_dimension_numbers<[1], [0], [0], [1], [0, 0, 1, 1], [], []>} : vector<16x64xbf16>, vector<64x32xbf16>, vector<16x32xf32> -> vector<16x32xf32>
    %c0_55 = arith.constant 0 : index
    %c0_56 = arith.constant 0 : index
    %c0_57 = arith.constant 0 : index
    %131 = vector.load %arg13[%c0_55, %c0_56, %c0_57] : memref<2x1x32xf32, #tpu.memory_space<vmem>>, vector<1x1x32xf32>
    %132 = vector.shape_cast %131 : vector<1x1x32xf32> to vector<1x32xf32>
    %133 = vector.broadcast %132 : vector<1x32xf32> to vector<16x32xf32>
    %134 = arith.addf %130, %133 : vector<16x32xf32>
    %135 = arith.addf %134, %105 : vector<16x32xf32>
    %c0_58 = arith.constant 0 : index
    %c0_59 = arith.constant 0 : index
    %c0_60 = arith.constant 0 : index
    %136 = vector.load %arg14[%c0_58, %c0_59, %c0_60] : memref<2x1x32xf32, #tpu.memory_space<vmem>>, vector<1x1x32xf32>
    %137 = vector.shape_cast %136 : vector<1x1x32xf32> to vector<1x32xf32>
    %c0_61 = arith.constant 0 : index
    %c0_62 = arith.constant 0 : index
    %c0_63 = arith.constant 0 : index
    %138 = vector.load %arg15[%c0_61, %c0_62, %c0_63] : memref<2x1x32xf32, #tpu.memory_space<vmem>>, vector<1x1x32xf32>
    %139 = vector.shape_cast %138 : vector<1x1x32xf32> to vector<1x32xf32>
    %cst_64 = arith.constant dense<0.000000e+00> : vector<16xf32>
    %140 = vector.multi_reduction <add>, %135, %cst_64 [1] : vector<16x32xf32> to vector<16xf32>
    %141 = vector.shape_cast %140 : vector<16xf32> to vector<16x1xf32>
    %cst_65 = arith.constant 3.200000e+01 : f32
    %142 = vector.broadcast %cst_65 : f32 to vector<16x1xf32>
    %143 = arith.divf %141, %142 : vector<16x1xf32>
    %144 = vector.broadcast %143 : vector<16x1xf32> to vector<16x32xf32>
    %145 = arith.subf %135, %144 : vector<16x32xf32>
    %146 = arith.mulf %145, %145 : vector<16x32xf32>
    %cst_66 = arith.constant dense<0.000000e+00> : vector<16xf32>
    %147 = vector.multi_reduction <add>, %146, %cst_66 [1] : vector<16x32xf32> to vector<16xf32>
    %148 = vector.shape_cast %147 : vector<16xf32> to vector<16x1xf32>
    %cst_67 = arith.constant 3.200000e+01 : f32
    %149 = vector.broadcast %cst_67 : f32 to vector<16x1xf32>
    %150 = arith.divf %148, %149 : vector<16x1xf32>
    %cst_68 = arith.constant 9.99999996E-13 : f32
    %151 = vector.broadcast %cst_68 : f32 to vector<16x1xf32>
    %152 = arith.addf %150, %151 : vector<16x1xf32>
    %153 = math.rsqrt %152 : vector<16x1xf32>
    %154 = vector.broadcast %143 : vector<16x1xf32> to vector<16x32xf32>
    %155 = arith.subf %135, %154 : vector<16x32xf32>
    %156 = vector.broadcast %153 : vector<16x1xf32> to vector<16x32xf32>
    %157 = arith.mulf %155, %156 : vector<16x32xf32>
    %158 = vector.broadcast %137 : vector<1x32xf32> to vector<16x32xf32>
    %159 = arith.mulf %157, %158 : vector<16x32xf32>
    %160 = vector.broadcast %139 : vector<1x32xf32> to vector<16x32xf32>
    %161 = arith.addf %159, %160 : vector<16x32xf32>
    %162 = arith.truncf %161 : vector<16x32xf32> to vector<16x32xbf16>
    %c1 = arith.constant 1 : index
    %c0_69 = arith.constant 0 : index
    %c0_70 = arith.constant 0 : index
    %163 = vector.load %arg4[%c1, %c0_69, %c0_70] : memref<2x32x96xbf16, #tpu.memory_space<vmem>>, vector<1x32x96xbf16>
    %164 = vector.shape_cast %163 : vector<1x32x96xbf16> to vector<32x96xbf16>
    %cst_71 = arith.constant dense<0.000000e+00> : vector<16x96xf32>
    %165 = tpu.matmul %162, %164, %cst_71 {dimension_numbers = #tpu.dot_dimension_numbers<[1], [0], [0], [1], [0, 0, 1, 1], [], []>} : vector<16x32xbf16>, vector<32x96xbf16>, vector<16x96xf32> -> vector<16x96xf32>
    %c1_72 = arith.constant 1 : index
    %c0_73 = arith.constant 0 : index
    %c0_74 = arith.constant 0 : index
    %166 = vector.load %arg5[%c1_72, %c0_73, %c0_74] : memref<2x1x96xf32, #tpu.memory_space<vmem>>, vector<1x1x96xf32>
    %167 = vector.shape_cast %166 : vector<1x1x96xf32> to vector<1x96xf32>
    %168 = vector.broadcast %167 : vector<1x96xf32> to vector<16x96xf32>
    %169 = arith.addf %165, %168 : vector<16x96xf32>
    %170 = vector.extract_strided_slice %169 {offsets = [0, 0], sizes = [16, 8], strides = [1, 1]} : vector<16x96xf32> to vector<16x8xf32>
    %171 = vector.extract_strided_slice %169 {offsets = [0, 8], sizes = [16, 8], strides = [1, 1]} : vector<16x96xf32> to vector<16x8xf32>
    %172 = vector.extract_strided_slice %169 {offsets = [0, 16], sizes = [16, 8], strides = [1, 1]} : vector<16x96xf32> to vector<16x8xf32>
    %173 = vector.extract_strided_slice %169 {offsets = [0, 24], sizes = [16, 8], strides = [1, 1]} : vector<16x96xf32> to vector<16x8xf32>
    %174 = tpu.concatenate %170, %171, %172, %173 in 0 : vector<16x8xf32>, vector<16x8xf32>, vector<16x8xf32>, vector<16x8xf32> -> vector<64x8xf32>
    %175 = arith.truncf %174 : vector<64x8xf32> to vector<64x8xbf16>
    %176 = vector.extract_strided_slice %169 {offsets = [0, 32], sizes = [16, 8], strides = [1, 1]} : vector<16x96xf32> to vector<16x8xf32>
    %177 = vector.extract_strided_slice %169 {offsets = [0, 40], sizes = [16, 8], strides = [1, 1]} : vector<16x96xf32> to vector<16x8xf32>
    %178 = vector.extract_strided_slice %169 {offsets = [0, 48], sizes = [16, 8], strides = [1, 1]} : vector<16x96xf32> to vector<16x8xf32>
    %179 = vector.extract_strided_slice %169 {offsets = [0, 56], sizes = [16, 8], strides = [1, 1]} : vector<16x96xf32> to vector<16x8xf32>
    %180 = tpu.concatenate %176, %177, %178, %179 in 0 : vector<16x8xf32>, vector<16x8xf32>, vector<16x8xf32>, vector<16x8xf32> -> vector<64x8xf32>
    %181 = arith.truncf %180 : vector<64x8xf32> to vector<64x8xbf16>
    %182 = vector.extract_strided_slice %169 {offsets = [0, 64], sizes = [16, 8], strides = [1, 1]} : vector<16x96xf32> to vector<16x8xf32>
    %183 = vector.extract_strided_slice %169 {offsets = [0, 72], sizes = [16, 8], strides = [1, 1]} : vector<16x96xf32> to vector<16x8xf32>
    %184 = vector.extract_strided_slice %169 {offsets = [0, 80], sizes = [16, 8], strides = [1, 1]} : vector<16x96xf32> to vector<16x8xf32>
    %185 = vector.extract_strided_slice %169 {offsets = [0, 88], sizes = [16, 8], strides = [1, 1]} : vector<16x96xf32> to vector<16x8xf32>
    %186 = tpu.concatenate %182, %183, %184, %185 in 0 : vector<16x8xf32>, vector<16x8xf32>, vector<16x8xf32>, vector<16x8xf32> -> vector<64x8xf32>
    %187 = arith.truncf %186 : vector<64x8xf32> to vector<64x8xbf16>
    %cst_75 = arith.constant dense<0.000000e+00> : vector<64x64xf32>
    %188 = tpu.matmul %175, %181, %cst_75 {dimension_numbers = #tpu.dot_dimension_numbers<[1], [1], [0], [0], [0, 0, 1, 0], [], []>} : vector<64x8xbf16>, vector<64x8xbf16>, vector<64x64xf32> -> vector<64x64xf32>
    %189 = arith.addf %188, %25 : vector<64x64xf32>
    %cst_76 = arith.constant dense<0xFF800000> : vector<64xf32>
    %190 = vector.multi_reduction <maximumf>, %189, %cst_76 [1] : vector<64x64xf32> to vector<64xf32>
    %191 = vector.shape_cast %190 : vector<64xf32> to vector<64x1xf32>
    %192 = vector.broadcast %191 : vector<64x1xf32> to vector<64x64xf32>
    %193 = arith.subf %189, %192 : vector<64x64xf32>
    %194 = math.exp %193 : vector<64x64xf32>
    %cst_77 = arith.constant dense<0.000000e+00> : vector<64xf32>
    %195 = vector.multi_reduction <add>, %194, %cst_77 [1] : vector<64x64xf32> to vector<64xf32>
    %196 = vector.shape_cast %195 : vector<64xf32> to vector<64x1xf32>
    %197 = tpu.reciprocal %196 {approx = true} : vector<64x1xf32> -> vector<64x1xf32>
    %198 = vector.broadcast %197 : vector<64x1xf32> to vector<64x64xf32>
    %199 = arith.mulf %194, %198 : vector<64x64xf32>
    %200 = arith.truncf %199 : vector<64x64xf32> to vector<64x64xbf16>
    %cst_78 = arith.constant dense<0.000000e+00> : vector<64x8xf32>
    %201 = tpu.matmul %200, %187, %cst_78 {dimension_numbers = #tpu.dot_dimension_numbers<[1], [0], [0], [1], [0, 0, 1, 1], [], []>} : vector<64x64xbf16>, vector<64x8xbf16>, vector<64x8xf32> -> vector<64x8xf32>
    %202 = vector.extract_strided_slice %201 {offsets = [0, 0], sizes = [16, 8], strides = [1, 1]} : vector<64x8xf32> to vector<16x8xf32>
    %203 = vector.extract_strided_slice %201 {offsets = [16, 0], sizes = [16, 8], strides = [1, 1]} : vector<64x8xf32> to vector<16x8xf32>
    %204 = vector.extract_strided_slice %201 {offsets = [32, 0], sizes = [16, 8], strides = [1, 1]} : vector<64x8xf32> to vector<16x8xf32>
    %205 = vector.extract_strided_slice %201 {offsets = [48, 0], sizes = [16, 8], strides = [1, 1]} : vector<64x8xf32> to vector<16x8xf32>
    %206 = tpu.concatenate %202, %203, %204, %205 in 1 : vector<16x8xf32>, vector<16x8xf32>, vector<16x8xf32>, vector<16x8xf32> -> vector<16x32xf32>
    %207 = arith.truncf %206 : vector<16x32xf32> to vector<16x32xbf16>
    %c1_79 = arith.constant 1 : index
    %c0_80 = arith.constant 0 : index
    %c0_81 = arith.constant 0 : index
    %208 = vector.load %arg6[%c1_79, %c0_80, %c0_81] : memref<2x32x32xbf16, #tpu.memory_space<vmem>>, vector<1x32x32xbf16>
    %209 = vector.shape_cast %208 : vector<1x32x32xbf16> to vector<32x32xbf16>
    %cst_82 = arith.constant dense<0.000000e+00> : vector<16x32xf32>
    %210 = tpu.matmul %207, %209, %cst_82 {dimension_numbers = #tpu.dot_dimension_numbers<[1], [0], [0], [1], [0, 0, 1, 1], [], []>} : vector<16x32xbf16>, vector<32x32xbf16>, vector<16x32xf32> -> vector<16x32xf32>
    %c1_83 = arith.constant 1 : index
    %c0_84 = arith.constant 0 : index
    %c0_85 = arith.constant 0 : index
    %211 = vector.load %arg7[%c1_83, %c0_84, %c0_85] : memref<2x1x32xf32, #tpu.memory_space<vmem>>, vector<1x1x32xf32>
    %212 = vector.shape_cast %211 : vector<1x1x32xf32> to vector<1x32xf32>
    %213 = vector.broadcast %212 : vector<1x32xf32> to vector<16x32xf32>
    %214 = arith.addf %210, %213 : vector<16x32xf32>
    %215 = arith.addf %214, %161 : vector<16x32xf32>
    %c1_86 = arith.constant 1 : index
    %c0_87 = arith.constant 0 : index
    %c0_88 = arith.constant 0 : index
    %216 = vector.load %arg8[%c1_86, %c0_87, %c0_88] : memref<2x1x32xf32, #tpu.memory_space<vmem>>, vector<1x1x32xf32>
    %217 = vector.shape_cast %216 : vector<1x1x32xf32> to vector<1x32xf32>
    %c1_89 = arith.constant 1 : index
    %c0_90 = arith.constant 0 : index
    %c0_91 = arith.constant 0 : index
    %218 = vector.load %arg9[%c1_89, %c0_90, %c0_91] : memref<2x1x32xf32, #tpu.memory_space<vmem>>, vector<1x1x32xf32>
    %219 = vector.shape_cast %218 : vector<1x1x32xf32> to vector<1x32xf32>
    %cst_92 = arith.constant dense<0.000000e+00> : vector<16xf32>
    %220 = vector.multi_reduction <add>, %215, %cst_92 [1] : vector<16x32xf32> to vector<16xf32>
    %221 = vector.shape_cast %220 : vector<16xf32> to vector<16x1xf32>
    %cst_93 = arith.constant 3.200000e+01 : f32
    %222 = vector.broadcast %cst_93 : f32 to vector<16x1xf32>
    %223 = arith.divf %221, %222 : vector<16x1xf32>
    %224 = vector.broadcast %223 : vector<16x1xf32> to vector<16x32xf32>
    %225 = arith.subf %215, %224 : vector<16x32xf32>
    %226 = arith.mulf %225, %225 : vector<16x32xf32>
    %cst_94 = arith.constant dense<0.000000e+00> : vector<16xf32>
    %227 = vector.multi_reduction <add>, %226, %cst_94 [1] : vector<16x32xf32> to vector<16xf32>
    %228 = vector.shape_cast %227 : vector<16xf32> to vector<16x1xf32>
    %cst_95 = arith.constant 3.200000e+01 : f32
    %229 = vector.broadcast %cst_95 : f32 to vector<16x1xf32>
    %230 = arith.divf %228, %229 : vector<16x1xf32>
    %cst_96 = arith.constant 9.99999996E-13 : f32
    %231 = vector.broadcast %cst_96 : f32 to vector<16x1xf32>
    %232 = arith.addf %230, %231 : vector<16x1xf32>
    %233 = math.rsqrt %232 : vector<16x1xf32>
    %234 = vector.broadcast %223 : vector<16x1xf32> to vector<16x32xf32>
    %235 = arith.subf %215, %234 : vector<16x32xf32>
    %236 = vector.broadcast %233 : vector<16x1xf32> to vector<16x32xf32>
    %237 = arith.mulf %235, %236 : vector<16x32xf32>
    %238 = vector.broadcast %217 : vector<1x32xf32> to vector<16x32xf32>
    %239 = arith.mulf %237, %238 : vector<16x32xf32>
    %240 = vector.broadcast %219 : vector<1x32xf32> to vector<16x32xf32>
    %241 = arith.addf %239, %240 : vector<16x32xf32>
    %242 = arith.truncf %241 : vector<16x32xf32> to vector<16x32xbf16>
    %c1_97 = arith.constant 1 : index
    %c0_98 = arith.constant 0 : index
    %c0_99 = arith.constant 0 : index
    %243 = vector.load %arg10[%c1_97, %c0_98, %c0_99] : memref<2x32x64xbf16, #tpu.memory_space<vmem>>, vector<1x32x64xbf16>
    %244 = vector.shape_cast %243 : vector<1x32x64xbf16> to vector<32x64xbf16>
    %cst_100 = arith.constant dense<0.000000e+00> : vector<16x64xf32>
    %245 = tpu.matmul %242, %244, %cst_100 {dimension_numbers = #tpu.dot_dimension_numbers<[1], [0], [0], [1], [0, 0, 1, 1], [], []>} : vector<16x32xbf16>, vector<32x64xbf16>, vector<16x64xf32> -> vector<16x64xf32>
    %c1_101 = arith.constant 1 : index
    %c0_102 = arith.constant 0 : index
    %c0_103 = arith.constant 0 : index
    %246 = vector.load %arg11[%c1_101, %c0_102, %c0_103] : memref<2x1x64xf32, #tpu.memory_space<vmem>>, vector<1x1x64xf32>
    %247 = vector.shape_cast %246 : vector<1x1x64xf32> to vector<1x64xf32>
    %248 = vector.broadcast %247 : vector<1x64xf32> to vector<16x64xf32>
    %249 = arith.addf %245, %248 : vector<16x64xf32>
    %250 = arith.mulf %249, %249 : vector<16x64xf32>
    %251 = arith.mulf %249, %250 : vector<16x64xf32>
    %cst_104 = arith.constant 4.471500e-02 : f32
    %252 = vector.broadcast %cst_104 : f32 to vector<16x64xf32>
    %253 = arith.mulf %252, %251 : vector<16x64xf32>
    %254 = arith.addf %249, %253 : vector<16x64xf32>
    %cst_105 = arith.constant 0.797884583 : f32
    %255 = vector.broadcast %cst_105 : f32 to vector<16x64xf32>
    %256 = arith.mulf %255, %254 : vector<16x64xf32>
    %257 = math.tanh %256 : vector<16x64xf32>
    %cst_106 = arith.constant 1.000000e+00 : f32
    %258 = vector.broadcast %cst_106 : f32 to vector<16x64xf32>
    %259 = arith.addf %258, %257 : vector<16x64xf32>
    %cst_107 = arith.constant 5.000000e-01 : f32
    %260 = vector.broadcast %cst_107 : f32 to vector<16x64xf32>
    %261 = arith.mulf %260, %259 : vector<16x64xf32>
    %262 = arith.mulf %249, %261 : vector<16x64xf32>
    %263 = arith.truncf %262 : vector<16x64xf32> to vector<16x64xbf16>
    %c1_108 = arith.constant 1 : index
    %c0_109 = arith.constant 0 : index
    %c0_110 = arith.constant 0 : index
    %264 = vector.load %arg12[%c1_108, %c0_109, %c0_110] : memref<2x64x32xbf16, #tpu.memory_space<vmem>>, vector<1x64x32xbf16>
    %265 = vector.shape_cast %264 : vector<1x64x32xbf16> to vector<64x32xbf16>
    %cst_111 = arith.constant dense<0.000000e+00> : vector<16x32xf32>
    %266 = tpu.matmul %263, %265, %cst_111 {dimension_numbers = #tpu.dot_dimension_numbers<[1], [0], [0], [1], [0, 0, 1, 1], [], []>} : vector<16x64xbf16>, vector<64x32xbf16>, vector<16x32xf32> -> vector<16x32xf32>
    %c1_112 = arith.constant 1 : index
    %c0_113 = arith.constant 0 : index
    %c0_114 = arith.constant 0 : index
    %267 = vector.load %arg13[%c1_112, %c0_113, %c0_114] : memref<2x1x32xf32, #tpu.memory_space<vmem>>, vector<1x1x32xf32>
    %268 = vector.shape_cast %267 : vector<1x1x32xf32> to vector<1x32xf32>
    %269 = vector.broadcast %268 : vector<1x32xf32> to vector<16x32xf32>
    %270 = arith.addf %266, %269 : vector<16x32xf32>
    %271 = arith.addf %270, %241 : vector<16x32xf32>
    %c1_115 = arith.constant 1 : index
    %c0_116 = arith.constant 0 : index
    %c0_117 = arith.constant 0 : index
    %272 = vector.load %arg14[%c1_115, %c0_116, %c0_117] : memref<2x1x32xf32, #tpu.memory_space<vmem>>, vector<1x1x32xf32>
    %273 = vector.shape_cast %272 : vector<1x1x32xf32> to vector<1x32xf32>
    %c1_118 = arith.constant 1 : index
    %c0_119 = arith.constant 0 : index
    %c0_120 = arith.constant 0 : index
    %274 = vector.load %arg15[%c1_118, %c0_119, %c0_120] : memref<2x1x32xf32, #tpu.memory_space<vmem>>, vector<1x1x32xf32>
    %275 = vector.shape_cast %274 : vector<1x1x32xf32> to vector<1x32xf32>
    %cst_121 = arith.constant dense<0.000000e+00> : vector<16xf32>
    %276 = vector.multi_reduction <add>, %271, %cst_121 [1] : vector<16x32xf32> to vector<16xf32>
    %277 = vector.shape_cast %276 : vector<16xf32> to vector<16x1xf32>
    %cst_122 = arith.constant 3.200000e+01 : f32
    %278 = vector.broadcast %cst_122 : f32 to vector<16x1xf32>
    %279 = arith.divf %277, %278 : vector<16x1xf32>
    %280 = vector.broadcast %279 : vector<16x1xf32> to vector<16x32xf32>
    %281 = arith.subf %271, %280 : vector<16x32xf32>
    %282 = arith.mulf %281, %281 : vector<16x32xf32>
    %cst_123 = arith.constant dense<0.000000e+00> : vector<16xf32>
    %283 = vector.multi_reduction <add>, %282, %cst_123 [1] : vector<16x32xf32> to vector<16xf32>
    %284 = vector.shape_cast %283 : vector<16xf32> to vector<16x1xf32>
    %cst_124 = arith.constant 3.200000e+01 : f32
    %285 = vector.broadcast %cst_124 : f32 to vector<16x1xf32>
    %286 = arith.divf %284, %285 : vector<16x1xf32>
    %cst_125 = arith.constant 9.99999996E-13 : f32
    %287 = vector.broadcast %cst_125 : f32 to vector<16x1xf32>
    %288 = arith.addf %286, %287 : vector<16x1xf32>
    %289 = math.rsqrt %288 : vector<16x1xf32>
    %290 = vector.broadcast %279 : vector<16x1xf32> to vector<16x32xf32>
    %291 = arith.subf %271, %290 : vector<16x32xf32>
    %292 = vector.broadcast %289 : vector<16x1xf32> to vector<16x32xf32>
    %293 = arith.mulf %291, %292 : vector<16x32xf32>
    %294 = vector.broadcast %273 : vector<1x32xf32> to vector<16x32xf32>
    %295 = arith.mulf %293, %294 : vector<16x32xf32>
    %296 = vector.broadcast %275 : vector<1x32xf32> to vector<16x32xf32>
    %297 = arith.addf %295, %296 : vector<16x32xf32>
    %c0_126 = arith.constant 0 : index
    %c0_127 = arith.constant 0 : index
    %298 = vector.load %arg16[%c0_126, %c0_127] : memref<1x32xbf16, #tpu.memory_space<vmem>>, vector<1x32xbf16>
    %299 = arith.truncf %297 : vector<16x32xf32> to vector<16x32xbf16>
    %cst_128 = arith.constant dense<0.000000e+00> : vector<1x16xf32>
    %300 = tpu.matmul %298, %299, %cst_128 {dimension_numbers = #tpu.dot_dimension_numbers<[1], [1], [0], [0], [0, 0, 1, 0], [], []>} : vector<1x32xbf16>, vector<16x32xbf16>, vector<1x16xf32> -> vector<1x16xf32>
    %c0_129 = arith.constant 0 : index
    %c0_130 = arith.constant 0 : index
    %301 = vector.load %arg17[%c0_129, %c0_130] : memref<1x1xf32, #tpu.memory_space<vmem>>, vector<1x1xf32>
    %302 = vector.broadcast %301 : vector<1x1xf32> to vector<1x16xf32>
    %303 = arith.addf %300, %302 : vector<1x16xf32>
    %304 = arith.negf %303 : vector<1x16xf32>
    %305 = math.exp %304 : vector<1x16xf32>
    %cst_131 = arith.constant 1.000000e+00 : f32
    %306 = vector.broadcast %cst_131 : f32 to vector<1x16xf32>
    %307 = arith.addf %306, %305 : vector<1x16xf32>
    %308 = arith.divf %306, %307 : vector<1x16xf32>
    %c0_132 = arith.constant 0 : index
    %c0_133 = arith.constant 0 : index
    %309 = vector.load %arg18[%c0_132, %c0_133] : memref<1x16xf32, #tpu.memory_space<vmem>>, vector<1x16xf32>
    tpu.vector_store %arg18[%c0_132, %c0_133], %308 {strides = array<i32>} : memref<1x16xf32, #tpu.memory_space<vmem>>, vector<1x16xf32>,
    return
  }
}

</mosaic_0001>

<llo_original>
// kernel: tpu_custom_call.1
$region0: #{tpu_custom_call.1}
  #allocation0 [shape = 'u32[]', space=smem, size = 0x4, offset = 0x4, fixed_abs, tag = 'smem constant byte address 0x4 - core index']
  #allocation1 [shape = 'u32[72,128]{1,0:T(1,128)}', space=vmem, size = 0x9000, scoped, tag = 'internal scratch']
  #allocation2 [shape = 'f32[1,1]{1,0:T(1,128)S(1)}', space=vmem, size = 0x200, scoped, tag = 'scoped memory for tpu_custom_call.1']
  %s0 = inlined_call_operand.hbm [shape: f32[16,32], index: 0, kind: input, shape index: {}]
  %s1 = inlined_call_operand.vmem [shape: f32[64,64], index: 1, kind: input, shape index: {}]
  %s2 = inlined_call_operand.vmem [shape: f32[1,32], index: 2, kind: input, shape index: {}]
  %s3 = inlined_call_operand.hbm [shape: f32[1,32], index: 3, kind: input, shape index: {}]
  %s4 = inlined_call_operand.vmem [shape: bf16[2,32,96], index: 4, kind: input, shape index: {}]
  %s5 = inlined_call_operand.vmem [shape: f32[2,1,96], index: 5, kind: input, shape index: {}]
  %s6 = inlined_call_operand.hbm [shape: bf16[2,32,32], index: 6, kind: input, shape index: {}]
  %s7 = inlined_call_operand.vmem [shape: f32[2,1,32], index: 7, kind: input, shape index: {}]
  %s8 = inlined_call_operand.vmem [shape: f32[2,1,32], index: 8, kind: input, shape index: {}]
  %s9 = inlined_call_operand.vmem [shape: f32[2,1,32], index: 9, kind: input, shape index: {}]
  %s10 = inlined_call_operand.hbm [shape: bf16[2,32,64], index: 10, kind: input, shape index: {}]
  %s11 = inlined_call_operand.vmem [shape: f32[2,1,64], index: 11, kind: input, shape index: {}]
  %s12 = inlined_call_operand.vmem [shape: bf16[2,64,32], index: 12, kind: input, shape index: {}]
  %s13 = inlined_call_operand.vmem [shape: f32[2,1,32], index: 13, kind: input, shape index: {}]
  %s14 = inlined_call_operand.vmem [shape: f32[2,1,32], index: 14, kind: input, shape index: {}]
  %s15 = inlined_call_operand.hbm [shape: f32[2,1,32], index: 15, kind: input, shape index: {}]
  %s16 = inlined_call_operand.vmem [shape: bf16[1,32], index: 16, kind: input, shape index: {}]
  %s17 = inlined_call_operand.<no memory space> [shape: f32[1,1], index: 17, kind: input, shape index: {}]
  %s18 = inlined_call_operand.hbm [shape: f32[1,16], index: 18, kind: output, shape index: {}]
  %s19 = sld [smem:[#allocation0]]
  $region102: #{tpu_custom_call.1} parent=0
    _
  %s21 = ssub.s32 1, %s19
  %s22 = scalar_select 0, %s21, %s19
  %v23 = vstv %s17
  %24 = vst [vmem:[#allocation2] sm:$0x1] %v23
  $region1: #{tpu_custom_call.1} parent=0
    #allocation3 [shape = 'u8[8192]{0}', space=vmem, size = 0x2000, scoped, tag = 'input window, operand 0, single buffered']
    #allocation4 [shape = 's32[1]{0}', space=sflag, size = 0x4, scoped, tag = 'scoped memory for tpu_custom_call.1']
    #allocation5 [shape = 's32[1]{0}', space=sflag, size = 0x4, scoped, tag = 'scoped memory for tpu_custom_call.1']
    #allocation6 [shape = 'u8[512]{0}', space=vmem, size = 0x400, scoped, tag = 'input window, operand 3, single buffered']
    #allocation7 [shape = 's32[1]{0}', space=sflag, size = 0x4, scoped, tag = 'scoped memory for tpu_custom_call.1']
    #allocation8 [shape = 'u8[16384]{0}', space=vmem, size = 0x4000, scoped, tag = 'input window, operand 6, single buffered']
    #allocation9 [shape = 'u8[16384]{0}', space=vmem, size = 0x4000, scoped, tag = 'input window, operand 10, single buffered']
    #allocation10 [shape = 's32[1]{0}', space=sflag, size = 0x4, scoped, tag = 'scoped memory for tpu_custom_call.1']
    #allocation11 [shape = 'u8[1024]{0}', space=vmem, size = 0x400, scoped, tag = 'input window, operand 15, single buffered']
    #allocation12 [shape = 'u8[512]{0}', space=vmem, size = 0x400, scoped, tag = 'output window, operand 0, single buffered']
    %25 = vsyncpa [#allocation4], 0
    %26 = vsyncpa [#allocation7], 0
    %27 = vsyncpa [#allocation10], 0
    %28 = vsyncpa [#allocation5], 0
    // Predicated region
    $region2: #{tpu_custom_call.1} parent=1 // pred_check
      _
    $region3: #{tpu_custom_call.1} parent=1 // pred_check_branch
      %30 = sbr.rel (0) target = $region5
    $region4: #{tpu_custom_call.1} parent=1 // pred_region
      %32 = vsyncadd [#allocation4], 0
      %s33 = sshll.u32 %s0, 4
      %s34 = int_to_ptr.hbm [resolvable:$true] %s33
      %s35 = sshll.u32 [#allocation3], 4
      %s36 = int_to_ptr.vmem [resolvable:$true] %s35
      %41 = dma.hbm_to_vmem [thread:$0]  %s34, 256, %s36, [#allocation4], 128, 128, 8
    $region5: #{tpu_custom_call.1} parent=1 // pred_fallthru
      _
    // Predicated region
    $region6: #{tpu_custom_call.1} parent=1 // pred_check
      _
    $region7: #{tpu_custom_call.1} parent=1 // pred_check_branch
      %43 = sbr.rel (0) target = $region9
    $region8: #{tpu_custom_call.1} parent=1 // pred_region
      _
    $region9: #{tpu_custom_call.1} parent=1 // pred_fallthru
      _
    // Predicated region
    $region10: #{tpu_custom_call.1} parent=1 // pred_check
      _
    $region11: #{tpu_custom_call.1} parent=1 // pred_check_branch
      %45 = sbr.rel (0) target = $region13
    $region12: #{tpu_custom_call.1} parent=1 // pred_region
      _
    $region13: #{tpu_custom_call.1} parent=1 // pred_fallthru
      _
    // Predicated region
    $region14: #{tpu_custom_call.1} parent=1 // pred_check
      _
    $region15: #{tpu_custom_call.1} parent=1 // pred_check_branch
      %47 = sbr.rel (0) target = $region17
    $region16: #{tpu_custom_call.1} parent=1 // pred_region
      %49 = vsyncadd [#allocation7], 0
      %s51 = sshll.u32 %s3, 4
      %s52 = int_to_ptr.hbm [resolvable:$true] %s51
      %s53 = sshll.u32 [#allocation6], 4
      %s54 = int_to_ptr.vmem [resolvable:$true] %s53
      %56 = dma.hbm_to_vmem [thread:$0]  %s52, 16, %s54, [#allocation7]
    $region17: #{tpu_custom_call.1} parent=1 // pred_fallthru
      _
    // Predicated region
    $region18: #{tpu_custom_call.1} parent=1 // pred_check
      _
    $region19: #{tpu_custom_call.1} parent=1 // pred_check_branch
      %58 = sbr.rel (0) target = $region21
    $region20: #{tpu_custom_call.1} parent=1 // pred_region
      _
    $region21: #{tpu_custom_call.1} parent=1 // pred_fallthru
      _
    // Predicated region
    $region22: #{tpu_custom_call.1} parent=1 // pred_check
      _
    $region23: #{tpu_custom_call.1} parent=1 // pred_check_branch
      %60 = sbr.rel (0) target = $region25
    $region24: #{tpu_custom_call.1} parent=1 // pred_region
      _
    $region25: #{tpu_custom_call.1} parent=1 // pred_fallthru
      _
    // Predicated region
    $region26: #{tpu_custom_call.1} parent=1 // pred_check
      _
    $region27: #{tpu_custom_call.1} parent=1 // pred_check_branch
      %62 = sbr.rel (0) target = $region29
    $region28: #{tpu_custom_call.1} parent=1 // pred_region
      %64 = vsyncadd [#allocation7], 0
      %s65 = sshll.u32 %s6, 4
      %s66 = int_to_ptr.hbm [resolvable:$true] %s65
      %s67 = sshll.u32 [#allocation8], 4
      %s68 = int_to_ptr.vmem [resolvable:$true] %s67
      %73 = dma.hbm_to_vmem [thread:$0]  %s66, 512, %s68, [#allocation7], 64, 64, 4
    $region29: #{tpu_custom_call.1} parent=1 // pred_fallthru
      _
    // Predicated region
    $region30: #{tpu_custom_call.1} parent=1 // pred_check
      _
    $region31: #{tpu_custom_call.1} parent=1 // pred_check_branch
      %75 = sbr.rel (0) target = $region33
    $region32: #{tpu_custom_call.1} parent=1 // pred_region
      _
    $region33: #{tpu_custom_call.1} parent=1 // pred_fallthru
      _
    // Predicated region
    $region34: #{tpu_custom_call.1} parent=1 // pred_check
      _
    $region35: #{tpu_custom_call.1} parent=1 // pred_check_branch
      %77 = sbr.rel (0) target = $region37
    $region36: #{tpu_custom_call.1} parent=1 // pred_region
      _
    $region37: #{tpu_custom_call.1} parent=1 // pred_fallthru
      _
    // Predicated region
    $region38: #{tpu_custom_call.1} parent=1 // pred_check
      _
    $region39: #{tpu_custom_call.1} parent=1 // pred_check_branch
      %79 = sbr.rel (0) target = $region41
    $region40: #{tpu_custom_call.1} parent=1 // pred_region
      _
    $region41: #{tpu_custom_call.1} parent=1 // pred_fallthru
      _
    // Predicated region
    $region42: #{tpu_custom_call.1} parent=1 // pred_check
      _
    $region43: #{tpu_custom_call.1} parent=1 // pred_check_branch
      %81 = sbr.rel (0) target = $region45
    $region44: #{tpu_custom_call.1} parent=1 // pred_region
      %83 = vsyncadd [#allocation10], 0
      %s84 = sshll.u32 %s10, 4
      %s85 = int_to_ptr.hbm [resolvable:$true] %s84
      %s86 = sshll.u32 [#allocation9], 4
      %s87 = int_to_ptr.vmem [resolvable:$true] %s86
      %92 = dma.hbm_to_vmem [thread:$0]  %s85, 512, %s87, [#allocation10], 64, 64, 4
    $region45: #{tpu_custom_call.1} parent=1 // pred_fallthru
      _
    // Predicated region
    $region46: #{tpu_custom_call.1} parent=1 // pred_check
      _
    $region47: #{tpu_custom_call.1} parent=1 // pred_check_branch
      %94 = sbr.rel (0) target = $region49
    $region48: #{tpu_custom_call.1} parent=1 // pred_region
      _
    $region49: #{tpu_custom_call.1} parent=1 // pred_fallthru
      _
    // Predicated region
    $region50: #{tpu_custom_call.1} parent=1 // pred_check
      _
    $region51: #{tpu_custom_call.1} parent=1 // pred_check_branch
      %96 = sbr.rel (0) target = $region53
    $region52: #{tpu_custom_call.1} parent=1 // pred_region
      _
    $region53: #{tpu_custom_call.1} parent=1 // pred_fallthru
      _
    // Predicated region
    $region54: #{tpu_custom_call.1} parent=1 // pred_check
      _
    $region55: #{tpu_custom_call.1} parent=1 // pred_check_branch
      %98 = sbr.rel (0) target = $region57
    $region56: #{tpu_custom_call.1} parent=1 // pred_region
      _
    $region57: #{tpu_custom_call.1} parent=1 // pred_fallthru
      _
    // Predicated region
    $region58: #{tpu_custom_call.1} parent=1 // pred_check
      _
    $region59: #{tpu_custom_call.1} parent=1 // pred_check_branch
      %100 = sbr.rel (0) target = $region61
    $region60: #{tpu_custom_call.1} parent=1 // pred_region
      _
    $region61: #{tpu_custom_call.1} parent=1 // pred_fallthru
      _
    // Predicated region
    $region62: #{tpu_custom_call.1} parent=1 // pred_check
      _
    $region63: #{tpu_custom_call.1} parent=1 // pred_check_branch
      %102 = sbr.rel (0) target = $region65
    $region64: #{tpu_custom_call.1} parent=1 // pred_region
      %104 = vsyncadd [#allocation10], 0
      %s105 = sshll.u32 %s15, 4
      %s106 = int_to_ptr.hbm [resolvable:$true] %s105
      %s107 = sshll.u32 [#allocation11], 4
      %s108 = int_to_ptr.vmem [resolvable:$true] %s107
      %113 = dma.hbm_to_vmem [thread:$0]  %s106, 32, %s108, [#allocation10], 16, 16, 1
    $region65: #{tpu_custom_call.1} parent=1 // pred_fallthru
      _
    // Predicated region
    $region66: #{tpu_custom_call.1} parent=1 // pred_check
      _
    $region67: #{tpu_custom_call.1} parent=1 // pred_check_branch
      %115 = sbr.rel (0) target = $region69
    $region68: #{tpu_custom_call.1} parent=1 // pred_region
      _
    $region69: #{tpu_custom_call.1} parent=1 // pred_fallthru
      _
    // Predicated region
    $region70: #{tpu_custom_call.1} parent=1 // pred_check
      _
    $region71: #{tpu_custom_call.1} parent=1 // pred_check_branch
      %117 = sbr.rel (0) target = $region73
    $region72: #{tpu_custom_call.1} parent=1 // pred_region
      _
    $region73: #{tpu_custom_call.1} parent=1 // pred_fallthru
      _
    // Predicated region
    $region74: #{tpu_custom_call.1} parent=1 // pred_check
      _
    $region75: #{tpu_custom_call.1} parent=1 // pred_check_branch
      %119 = sbr.rel (0) target = $region77
    $region76: #{tpu_custom_call.1} parent=1 // pred_region
      %121 = dma.done [#allocation4], 256
    $region77: #{tpu_custom_call.1} parent=1 // pred_fallthru
      _
    // Predicated region
    $region78: #{tpu_custom_call.1} parent=1 // pred_check
      _
    $region79: #{tpu_custom_call.1} parent=1 // pred_check_branch
      %123 = sbr.rel (0) target = $region81
    $region80: #{tpu_custom_call.1} parent=1 // pred_region
      %125 = dma.done [#allocation7], 16
    $region81: #{tpu_custom_call.1} parent=1 // pred_fallthru
      _
    // Predicated region
    $region82: #{tpu_custom_call.1} parent=1 // pred_check
      _
    $region83: #{tpu_custom_call.1} parent=1 // pred_check_branch
      %127 = sbr.rel (0) target = $region85
    $region84: #{tpu_custom_call.1} parent=1 // pred_region
      %129 = dma.done [#allocation7], 512
    $region85: #{tpu_custom_call.1} parent=1 // pred_fallthru
      _
    // Predicated region
    $region86: #{tpu_custom_call.1} parent=1 // pred_check
      _
    $region87: #{tpu_custom_call.1} parent=1 // pred_check_branch
      %131 = sbr.rel (0) target = $region89
    $region88: #{tpu_custom_call.1} parent=1 // pred_region
      %133 = dma.done [#allocation10], 512
    $region89: #{tpu_custom_call.1} parent=1 // pred_fallthru
      _
    // Predicated region
    $region90: #{tpu_custom_call.1} parent=1 // pred_check
      _
    $region91: #{tpu_custom_call.1} parent=1 // pred_check_branch
      %135 = sbr.rel (0) target = $region93
    $region92: #{tpu_custom_call.1} parent=1 // pred_region
      %137 = dma.done [#allocation10], 32
    $region93: #{tpu_custom_call.1} parent=1 // pred_fallthru
      _
    %v139 = vld [vmem:[#allocation3] sm:$0xff]
    %v140 = vld [vmem:[#allocation3 + $0x8] sm:$0xff]
    %v141 = vld [vmem:[%s2] sm:$0x1]
    %v142 = vld [vmem:[#allocation6] sm:$0x1]
    %vm143 = vcmask 261120
    %v144 = vsel %vm143, %v139, 0.0
    %145 = vadd.xlane.f32.xlu0 %v144
    %v146 = vpop.xlane.xlu0 %145
    %v147 = vsel %vm143, %v140, 0.0
    %148 = vadd.xlane.f32.xlu0 %v147
    %v149 = vpop.xlane.xlu0 %148
    %v150 = vrcp.pop 32.0
    %v151 = vmul.f32 32.0, %v150
    %v152 = vsub.f32 1.0, %v151
    %v153 = vmul.f32 %v150, %v152
    %v154 = vadd.f32 %v150, %v153
    %vm155 = vweird.f32 %v150
    %v156 = vsel %vm155, %v150, %v154
    %v157 = vmul.f32 %v146, %v156
    %v158 = vmul.f32 %v149, %v156
    %v159 = vsub.f32 %v139, %v157
    %v160 = vsub.f32 %v140, %v158
    %v161 = vmul.f32 %v159, %v159
    %v162 = vmul.f32 %v160, %v160
    %v163 = vsel %vm143, %v161, 0.0
    %164 = vadd.xlane.f32.xlu0 %v163
    %v165 = vpop.xlane.xlu0 %164
    %v166 = vsel %vm143, %v162, 0.0
    %167 = vadd.xlane.f32.xlu0 %v166
    %v168 = vpop.xlane.xlu0 %167
    %v169 = vmul.f32 %v165, %v156
    %v170 = vmul.f32 %v168, %v156
    %v171 = vadd.f32 %v169, 1e-12
    %v172 = vadd.f32 %v170, 1e-12
    %v173 = vrsqrt.pop %v171
    %v174 = vmul.f32 %v173, %v171
    %v175 = vmul.f32 %v174, %v173
    %v176 = vmul.f32 0.5, %v175
    %v177 = vsub.f32 1.5, %v176
    %v178 = vmul.f32 %v173, %v177
    %vm179 = vweird.f32 %v171
    %vm180 = vweird.f32 %v173
    %vm181 = vmor %vm179, %vm180
    %v182 = vsel %vm181, %v173, %v178
    %v183 = vrsqrt.pop %v172
    %v184 = vmul.f32 %v183, %v172
    %v185 = vmul.f32 %v184, %v183
    %v186 = vmul.f32 0.5, %v185
    %v187 = vsub.f32 1.5, %v186
    %v188 = vmul.f32 %v183, %v187
    %vm189 = vweird.f32 %v172
    %vm190 = vweird.f32 %v183
    %vm191 = vmor %vm189, %vm190
    %v192 = vsel %vm191, %v183, %v188
    %v193 = vmul.f32 %v159, %v182
    %v194 = vmul.f32 %v160, %v192
    %v196 = vperm.slane %v141, 0
    %v198 = vmul.f32 %v193, %v196
    %v199 = vmul.f32 %v194, %v196
    %v201 = vperm.slane %v142, 0
    %v203 = vadd.f32 %v198, %v201
    %v204 = vadd.f32 %v199, %v201
    %v205 = vld [vmem:[%s1] sm:$0xff]
    %v206 = vld [vmem:[%s1 + $0x8] sm:$0xff]
    %v207 = vld [vmem:[%s1 + $0x10] sm:$0xff]
    %v208 = vld [vmem:[%s1 + $0x18] sm:$0xff]
    %v209 = vld [vmem:[%s1 + $0x20] sm:$0xff]
    %v210 = vld [vmem:[%s1 + $0x28] sm:$0xff]
    %v211 = vld [vmem:[%s1 + $0x30] sm:$0xff]
    %v212 = vld [vmem:[%s1 + $0x38] sm:$0xff]
    %v213 = vpack.c.bf16 %v204, %v203
    %v214 = vld [vmem:[%s4] sm:$0xf]
    %v215 = vld [vmem:[%s4 + $0x4] sm:$0xf]
    %v216 = vld [vmem:[%s4 + $0x8] sm:$0xf]
    %v217 = vld [vmem:[%s4 + $0xc] sm:$0xf]
    %v218 = vld [vmem:[%s5] sm:$0x1]
    %v220 = vperm.slane %v218, 0
    %v226 = vunpack.c.l.b16 %v214
    %v227 = vunpack.c.l.b16 %v215
    %v228 = vunpack.c.l.b16 %v216
    %v229 = vunpack.c.l.b16 %v217
    %v230 = vpack.c.b16 %v227, %v226
    %v231 = vpack.c.b16 %v229, %v228
    %v235 = vsel %vm143, %v213, 0
    %237 = vmatpush.bf16.msra.mxu0 0
    %238 = vmatpush.bf16.msra.mxu0 0
    %239 = vmatpush.bf16.msra.mxu0 0
    %240 = vmatpush.bf16.msra.mxu0 0
    %241 = vmatpush.bf16.msra.mxu0 0
    %242 = vmatpush.bf16.msra.mxu0 0
    %243 = vmatpush.bf16.msra.mxu0 %v231
    %244 = vmatpush.bf16.msra.mxu0 %v230
    %245 = vmatmul.bf16.gmra.mxu0 %v235
    %v246 = vpop.f32.mrf.mxu0
    %v247 = vadd.f32 %v220, %v246
    %v248 = vpop.f32.mrf.mxu0
    %v249 = vadd.f32 %v220, %v248
    %250 = vdwg.mxu0
    %253 = vrot.lane.b32.xlu0 %v247, 120
    %v254 = vpop.permute.xlu0 %253
    %255 = vrot.lane.b32.xlu0 %v249, 120
    %v256 = vpop.permute.xlu0 %255
    %259 = vrot.lane.b32.xlu0 %v247, 112
    %v260 = vpop.permute.xlu0 %259
    %261 = vrot.lane.b32.xlu0 %v249, 112
    %v262 = vpop.permute.xlu0 %261
    %265 = vrot.lane.b32.xlu0 %v247, 104
    %v266 = vpop.permute.xlu0 %265
    %267 = vrot.lane.b32.xlu0 %v249, 104
    %v268 = vpop.permute.xlu0 %267
    %v271 = vpack.c.bf16 %v249, %v247
    %v272 = vpack.c.bf16 %v256, %v254
    %v273 = vpack.c.bf16 %v262, %v260
    %v274 = vpack.c.bf16 %v268, %v266
    %279 = vrot.lane.b32.xlu0 %v271, 96
    %v280 = vpop.permute.xlu0 %279
    %281 = vrot.lane.b32.xlu0 %v272, 96
    %v282 = vpop.permute.xlu0 %281
    %283 = vrot.lane.b32.xlu0 %v273, 96
    %v284 = vpop.permute.xlu0 %283
    %285 = vrot.lane.b32.xlu0 %v274, 96
    %v286 = vpop.permute.xlu0 %285
    %vm287 = vcmask 64512
    %v289 = vsel %vm287, %v271, 0
    %v292 = vsel %vm287, %v272, 0
    %v295 = vsel %vm287, %v273, 0
    %v298 = vsel %vm287, %v274, 0
    %v301 = vsel %vm287, %v280, 0
    %v304 = vsel %vm287, %v282, 0
    %v307 = vsel %vm287, %v284, 0
    %v310 = vsel %vm287, %v286, 0
    %312 = vmatpush.bf16.xpose.msra.mxu0 0
    %313 = vmatpush.bf16.xpose.msra.mxu0 0
    %314 = vmatpush.bf16.xpose.msra.mxu0 0
    %315 = vmatpush.bf16.xpose.msra.mxu0 0
    %316 = vmatpush.bf16.xpose.msra.mxu0 %v310
    %317 = vmatpush.bf16.xpose.msra.mxu0 %v307
    %318 = vmatpush.bf16.xpose.msra.mxu0 %v304
    %319 = vmatpush.bf16.xpose.msra.mxu0 %v301
    %320 = vmatmul.bf16.gmra.mxu0 %v289
    %v321 = vpop.f32.mrf.mxu0
    %v322 = vadd.f32 %v205, %v321
    %v323 = vpop.f32.mrf.mxu0
    %v324 = vadd.f32 %v206, %v323
    %325 = vmatmul.bf16.gmra.mxu0 %v292
    %v326 = vpop.f32.mrf.mxu0
    %v327 = vadd.f32 %v207, %v326
    %v328 = vpop.f32.mrf.mxu0
    %v329 = vadd.f32 %v208, %v328
    %330 = vmatmul.bf16.gmra.mxu0 %v295
    %v331 = vpop.f32.mrf.mxu0
    %v332 = vadd.f32 %v209, %v331
    %v333 = vpop.f32.mrf.mxu0
    %v334 = vadd.f32 %v210, %v333
    %335 = vmatmul.bf16.gmra.mxu0 %v298
    %v336 = vpop.f32.mrf.mxu0
    %v337 = vadd.f32 %v211, %v336
    %v338 = vpop.f32.mrf.mxu0
    %v339 = vadd.f32 %v212, %v338
    %340 = vdwg.mxu0
    %vm341 = vcmask 523264
    %v342 = vsel %vm341, %v322, -inf
    %343 = vmax.xlane.f32.xlu0 %v342
    %v344 = vpop.xlane.xlu0 %343
    %v345 = vsel %vm341, %v324, -inf
    %346 = vmax.xlane.f32.xlu0 %v345
    %v347 = vpop.xlane.xlu0 %346
    %v348 = vsel %vm341, %v327, -inf
    %349 = vmax.xlane.f32.xlu0 %v348
    %v350 = vpop.xlane.xlu0 %349
    %v351 = vsel %vm341, %v329, -inf
    %352 = vmax.xlane.f32.xlu0 %v351
    %v353 = vpop.xlane.xlu0 %352
    %v354 = vsel %vm341, %v332, -inf
    %355 = vmax.xlane.f32.xlu0 %v354
    %v356 = vpop.xlane.xlu0 %355
    %v357 = vsel %vm341, %v334, -inf
    %358 = vmax.xlane.f32.xlu0 %v357
    %v359 = vpop.xlane.xlu0 %358
    %v360 = vsel %vm341, %v337, -inf
    %361 = vmax.xlane.f32.xlu0 %v360
    %v362 = vpop.xlane.xlu0 %361
    %v363 = vsel %vm341, %v339, -inf
    %364 = vmax.xlane.f32.xlu0 %v363
    %v365 = vpop.xlane.xlu0 %364
    %v366 = vsub.f32 %v322, %v344
    %v367 = vsub.f32 %v324, %v347
    %v368 = vsub.f32 %v327, %v350
    %v369 = vsub.f32 %v329, %v353
    %v370 = vsub.f32 %v332, %v356
    %v371 = vsub.f32 %v334, %v359
    %v372 = vsub.f32 %v337, %v362
    %v373 = vsub.f32 %v339, %v365
    %v374 = vmul.f32 %v366, 1.442695
    %v375 = vpow.pop %v374
    %v376 = vmul.f32 %v367, 1.442695
    %v377 = vpow.pop %v376
    %v378 = vmul.f32 %v368, 1.442695
    %v379 = vpow.pop %v378
    %v380 = vmul.f32 %v369, 1.442695
    %v381 = vpow.pop %v380
    %v382 = vmul.f32 %v370, 1.442695
    %v383 = vpow.pop %v382
    %v384 = vmul.f32 %v371, 1.442695
    %v385 = vpow.pop %v384
    %v386 = vmul.f32 %v372, 1.442695
    %v387 = vpow.pop %v386
    %v388 = vmul.f32 %v373, 1.442695
    %v389 = vpow.pop %v388
    %v390 = vsel %vm341, %v375, 0.0
    %391 = vadd.xlane.f32.xlu0 %v390
    %v392 = vpop.xlane.xlu0 %391
    %v393 = vsel %vm341, %v377, 0.0
    %394 = vadd.xlane.f32.xlu0 %v393
    %v395 = vpop.xlane.xlu0 %394
    %v396 = vsel %vm341, %v379, 0.0
    %397 = vadd.xlane.f32.xlu0 %v396
    %v398 = vpop.xlane.xlu0 %397
    %v399 = vsel %vm341, %v381, 0.0
    %400 = vadd.xlane.f32.xlu0 %v399
    %v401 = vpop.xlane.xlu0 %400
    %v402 = vsel %vm341, %v383, 0.0
    %403 = vadd.xlane.f32.xlu0 %v402
    %v404 = vpop.xlane.xlu0 %403
    %v405 = vsel %vm341, %v385, 0.0
    %406 = vadd.xlane.f32.xlu0 %v405
    %v407 = vpop.xlane.xlu0 %406
    %v408 = vsel %vm341, %v387, 0.0
    %409 = vadd.xlane.f32.xlu0 %v408
    %v410 = vpop.xlane.xlu0 %409
    %v411 = vsel %vm341, %v389, 0.0
    %412 = vadd.xlane.f32.xlu0 %v411
    %v413 = vpop.xlane.xlu0 %412
    %v414 = vrcp.pop %v392
    %v415 = vrcp.pop %v395
    %v416 = vrcp.pop %v398
    %v417 = vrcp.pop %v401
    %v418 = vrcp.pop %v404
    %v419 = vrcp.pop %v407
    %v420 = vrcp.pop %v410
    %v421 = vrcp.pop %v413
    %v422 = vmul.f32 %v375, %v414
    %v423 = vmul.f32 %v377, %v415
    %v424 = vmul.f32 %v379, %v416
    %v425 = vmul.f32 %v381, %v417
    %v426 = vmul.f32 %v383, %v418
    %v427 = vmul.f32 %v385, %v419
    %v428 = vmul.f32 %v387, %v420
    %v429 = vmul.f32 %v389, %v421
    %v430 = vpack.c.bf16 %v423, %v422
    %v431 = vpack.c.bf16 %v425, %v424
    %v432 = vpack.c.bf16 %v427, %v426
    %v433 = vpack.c.bf16 %v429, %v428
    %434 = vrot.lane.b32.xlu0 %v271, 64
    %v435 = vpop.permute.xlu0 %434
    %436 = vrot.lane.b32.xlu0 %v272, 64
    %v437 = vpop.permute.xlu0 %436
    %438 = vrot.lane.b32.xlu0 %v273, 64
    %v439 = vpop.permute.xlu0 %438
    %440 = vrot.lane.b32.xlu0 %v274, 64
    %v441 = vpop.permute.xlu0 %440
    %v447 = vsel %vm341, %v430, 0
    %v450 = vsel %vm341, %v431, 0
    %v453 = vsel %vm341, %v432, 0
    %v456 = vsel %vm341, %v433, 0
    %458 = vmatpush.bf16.msra.mxu0 0
    %459 = vmatpush.bf16.msra.mxu0 0
    %460 = vmatpush.bf16.msra.mxu0 0
    %461 = vmatpush.bf16.msra.mxu0 0
    %462 = vmatpush.bf16.msra.mxu0 %v441
    %463 = vmatpush.bf16.msra.mxu0 %v439
    %464 = vmatpush.bf16.msra.mxu0 %v437
    %465 = vmatpush.bf16.msra.mxu0 %v435
    %466 = vmatmul.bf16.gmra.mxu0 %v447
    %v467 = vpop.f32.mrf.mxu0
    %v468 = vadd.f32 0.0, %v467
    %v469 = vpop.f32.mrf.mxu0
    %v470 = vadd.f32 0.0, %v469
    %471 = vmatmul.bf16.gmra.mxu0 %v450
    %v472 = vpop.f32.mrf.mxu0
    %v473 = vadd.f32 0.0, %v472
    %v474 = vpop.f32.mrf.mxu0
    %v475 = vadd.f32 0.0, %v474
    %476 = vmatmul.bf16.gmra.mxu0 %v453
    %v477 = vpop.f32.mrf.mxu0
    %v478 = vadd.f32 0.0, %v477
    %v479 = vpop.f32.mrf.mxu0
    %v480 = vadd.f32 0.0, %v479
    %481 = vmatmul.bf16.gmra.mxu0 %v456
    %v482 = vpop.f32.mrf.mxu0
    %v483 = vadd.f32 0.0, %v482
    %v484 = vpop.f32.mrf.mxu0
    %v485 = vadd.f32 0.0, %v484
    %486 = vdwg.mxu0
    %489 = vrot.lane.b32.xlu0 %v473, 8
    %v490 = vpop.permute.xlu0 %489
    %491 = vrot.lane.b32.xlu0 %v475, 8
    %v492 = vpop.permute.xlu0 %491
    %497 = vrot.lane.b32.xlu0 %v478, 16
    %v498 = vpop.permute.xlu0 %497
    %499 = vrot.lane.b32.xlu0 %v480, 16
    %v500 = vpop.permute.xlu0 %499
    %505 = vrot.lane.b32.xlu0 %v483, 24
    %v506 = vpop.permute.xlu0 %505
    %507 = vrot.lane.b32.xlu0 %v485, 24
    %v508 = vpop.permute.xlu0 %507
    %v511 = vsel %vm287, %v468, %v490
    %v512 = vsel %vm287, %v470, %v492
    %vm513 = vcmask 130048
    %v514 = vsel %vm513, %v511, %v498
    %v515 = vsel %vm513, %v512, %v500
    %vm516 = vcmask 195584
    %v517 = vsel %vm516, %v514, %v506
    %v518 = vsel %vm516, %v515, %v508
    %v519 = vpack.c.bf16 %v518, %v517
    %v520 = vld [vmem:[#allocation8] sm:$0xf]
    %v521 = vld [vmem:[#allocation8 + $0x4] sm:$0xf]
    %v522 = vld [vmem:[#allocation8 + $0x8] sm:$0xf]
    %v523 = vld [vmem:[#allocation8 + $0xc] sm:$0xf]
    %v524 = vld [vmem:[%s7] sm:$0x1]
    %v526 = vperm.slane %v524, 0
    %v532 = vunpack.c.l.b16 %v520
    %v533 = vunpack.c.l.b16 %v521
    %v534 = vunpack.c.l.b16 %v522
    %v535 = vunpack.c.l.b16 %v523
    %v536 = vpack.c.b16 %v533, %v532
    %v537 = vpack.c.b16 %v535, %v534
    %v541 = vsel %vm143, %v519, 0
    %543 = vmatpush.bf16.msra.mxu0 0
    %544 = vmatpush.bf16.msra.mxu0 0
    %545 = vmatpush.bf16.msra.mxu0 0
    %546 = vmatpush.bf16.msra.mxu0 0
    %547 = vmatpush.bf16.msra.mxu0 0
    %548 = vmatpush.bf16.msra.mxu0 0
    %549 = vmatpush.bf16.msra.mxu0 %v537
    %550 = vmatpush.bf16.msra.mxu0 %v536
    %551 = vmatmul.bf16.gmra.mxu0 %v541
    %v552 = vpop.f32.mrf.mxu0
    %v553 = vadd.f32 %v526, %v552
    %v554 = vpop.f32.mrf.mxu0
    %v555 = vadd.f32 %v526, %v554
    %556 = vdwg.mxu0
    %v557 = vadd.f32 %v553, %v203
    %v558 = vadd.f32 %v555, %v204
    %v559 = vld [vmem:[%s8] sm:$0x1]
    %v560 = vld [vmem:[%s9] sm:$0x1]
    %v561 = vsel %vm143, %v557, 0.0
    %562 = vadd.xlane.f32.xlu0 %v561
    %v563 = vpop.xlane.xlu0 %562
    %v564 = vsel %vm143, %v558, 0.0
    %565 = vadd.xlane.f32.xlu0 %v564
    %v566 = vpop.xlane.xlu0 %565
    %v567 = vmul.f32 %v563, %v156
    %v568 = vmul.f32 %v566, %v156
    %v569 = vsub.f32 %v557, %v567
    %v570 = vsub.f32 %v558, %v568
    %v571 = vmul.f32 %v569, %v569
    %v572 = vmul.f32 %v570, %v570
    %v573 = vsel %vm143, %v571, 0.0
    %574 = vadd.xlane.f32.xlu0 %v573
    %v575 = vpop.xlane.xlu0 %574
    %v576 = vsel %vm143, %v572, 0.0
    %577 = vadd.xlane.f32.xlu0 %v576
    %v578 = vpop.xlane.xlu0 %577
    %v579 = vmul.f32 %v575, %v156
    %v580 = vmul.f32 %v578, %v156
    %v581 = vadd.f32 %v579, 1e-12
    %v582 = vadd.f32 %v580, 1e-12
    %v583 = vrsqrt.pop %v581
    %v584 = vmul.f32 %v583, %v581
    %v585 = vmul.f32 %v584, %v583
    %v586 = vmul.f32 0.5, %v585
    %v587 = vsub.f32 1.5, %v586
    %v588 = vmul.f32 %v583, %v587
    %vm589 = vweird.f32 %v581
    %vm590 = vweird.f32 %v583
    %vm591 = vmor %vm589, %vm590
    %v592 = vsel %vm591, %v583, %v588
    %v593 = vrsqrt.pop %v582
    %v594 = vmul.f32 %v593, %v582
    %v595 = vmul.f32 %v594, %v593
    %v596 = vmul.f32 0.5, %v595
    %v597 = vsub.f32 1.5, %v596
    %v598 = vmul.f32 %v593, %v597
    %vm599 = vweird.f32 %v582
    %vm600 = vweird.f32 %v593
    %vm601 = vmor %vm599, %vm600
    %v602 = vsel %vm601, %v593, %v598
    %v603 = vmul.f32 %v569, %v592
    %v604 = vmul.f32 %v570, %v602
    %v606 = vperm.slane %v559, 0
    %v608 = vmul.f32 %v603, %v606
    %v609 = vmul.f32 %v604, %v606
    %v611 = vperm.slane %v560, 0
    %v613 = vadd.f32 %v608, %v611
    %v614 = vadd.f32 %v609, %v611
    %v615 = vpack.c.bf16 %v614, %v613
    %v616 = vld [vmem:[#allocation9] sm:$0xf]
    %v617 = vld [vmem:[#allocation9 + $0x4] sm:$0xf]
    %v618 = vld [vmem:[#allocation9 + $0x8] sm:$0xf]
    %v619 = vld [vmem:[#allocation9 + $0xc] sm:$0xf]
    %v620 = vld [vmem:[%s11] sm:$0x1]
    %v622 = vperm.slane %v620, 0
    %v628 = vunpack.c.l.b16 %v616
    %v629 = vunpack.c.l.b16 %v617
    %v630 = vunpack.c.l.b16 %v618
    %v631 = vunpack.c.l.b16 %v619
    %v632 = vpack.c.b16 %v629, %v628
    %v633 = vpack.c.b16 %v631, %v630
    %v637 = vsel %vm143, %v615, 0
    %639 = vmatpush.bf16.msra.mxu0 0
    %640 = vmatpush.bf16.msra.mxu0 0
    %641 = vmatpush.bf16.msra.mxu0 0
    %642 = vmatpush.bf16.msra.mxu0 0
    %643 = vmatpush.bf16.msra.mxu0 0
    %644 = vmatpush.bf16.msra.mxu0 0
    %645 = vmatpush.bf16.msra.mxu0 %v633
    %646 = vmatpush.bf16.msra.mxu0 %v632
    %647 = vmatmul.bf16.gmra.mxu0 %v637
    %v648 = vpop.f32.mrf.mxu0
    %v649 = vadd.f32 %v622, %v648
    %v650 = vpop.f32.mrf.mxu0
    %v651 = vadd.f32 %v622, %v650
    %652 = vdwg.mxu0
    %v653 = vmul.f32 %v649, %v649
    %v654 = vmul.f32 %v651, %v651
    %v655 = vmul.f32 %v649, %v653
    %v656 = vmul.f32 %v651, %v654
    %v657 = vmul.f32 %v655, 0.044715
    %v658 = vmul.f32 %v656, 0.044715
    %v659 = vadd.f32 %v649, %v657
    %v660 = vadd.f32 %v651, %v658
    %v661 = vmul.f32 %v659, 0.7978846
    %v662 = vmul.f32 %v660, 0.7978846
    %v663 = vtanh.pop %v661
    %v664 = vtanh.pop %v662
    %v665 = vadd.f32 %v663, 1.0
    %v666 = vadd.f32 %v664, 1.0
    %v667 = vmul.f32 %v665, 0.5
    %v668 = vmul.f32 %v666, 0.5
    %v669 = vmul.f32 %v649, %v667
    %v670 = vmul.f32 %v651, %v668
    %v671 = vpack.c.bf16 %v670, %v669
    %v672 = vld [vmem:[%s12] sm:$0xf]
    %v673 = vld [vmem:[%s12 + $0x4] sm:$0xf]
    %v674 = vld [vmem:[%s12 + $0x8] sm:$0xf]
    %v675 = vld [vmem:[%s12 + $0xc] sm:$0xf]
    %v676 = vld [vmem:[%s12 + $0x10] sm:$0xf]
    %v677 = vld [vmem:[%s12 + $0x14] sm:$0xf]
    %v678 = vld [vmem:[%s12 + $0x18] sm:$0xf]
    %v679 = vld [vmem:[%s12 + $0x1c] sm:$0xf]
    %v680 = vld [vmem:[%s13] sm:$0x1]
    %v682 = vperm.slane %v680, 0
    %v692 = vunpack.c.l.b16 %v672
    %v693 = vunpack.c.l.b16 %v673
    %v694 = vunpack.c.l.b16 %v674
    %v695 = vunpack.c.l.b16 %v675
    %v696 = vunpack.c.l.b16 %v676
    %v697 = vunpack.c.l.b16 %v677
    %v698 = vunpack.c.l.b16 %v678
    %v699 = vunpack.c.l.b16 %v679
    %v700 = vpack.c.b16 %v693, %v692
    %v701 = vpack.c.b16 %v695, %v694
    %v702 = vpack.c.b16 %v697, %v696
    %v703 = vpack.c.b16 %v699, %v698
    %v709 = vsel %vm341, %v671, 0
    %711 = vmatpush.bf16.msra.mxu0 0
    %712 = vmatpush.bf16.msra.mxu0 0
    %713 = vmatpush.bf16.msra.mxu0 0
    %714 = vmatpush.bf16.msra.mxu0 0
    %715 = vmatpush.bf16.msra.mxu0 %v703
    %716 = vmatpush.bf16.msra.mxu0 %v702
    %717 = vmatpush.bf16.msra.mxu0 %v701
    %718 = vmatpush.bf16.msra.mxu0 %v700
    %719 = vmatmul.bf16.gmra.mxu0 %v709
    %v720 = vpop.f32.mrf.mxu0
    %v721 = vadd.f32 %v682, %v720
    %v722 = vpop.f32.mrf.mxu0
    %v723 = vadd.f32 %v682, %v722
    %724 = vdwg.mxu0
    %v725 = vadd.f32 %v721, %v613
    %v726 = vadd.f32 %v723, %v614
    %v727 = vld [vmem:[%s14] sm:$0x1]
    %v728 = vld [vmem:[#allocation11] sm:$0x1]
    %v729 = vsel %vm143, %v725, 0.0
    %730 = vadd.xlane.f32.xlu0 %v729
    %v731 = vpop.xlane.xlu0 %730
    %v732 = vsel %vm143, %v726, 0.0
    %733 = vadd.xlane.f32.xlu0 %v732
    %v734 = vpop.xlane.xlu0 %733
    %v735 = vmul.f32 %v731, %v156
    %v736 = vmul.f32 %v734, %v156
    %v737 = vsub.f32 %v725, %v735
    %v738 = vsub.f32 %v726, %v736
    %v739 = vmul.f32 %v737, %v737
    %v740 = vmul.f32 %v738, %v738
    %v741 = vsel %vm143, %v739, 0.0
    %742 = vadd.xlane.f32.xlu0 %v741
    %v743 = vpop.xlane.xlu0 %742
    %v744 = vsel %vm143, %v740, 0.0
    %745 = vadd.xlane.f32.xlu0 %v744
    %v746 = vpop.xlane.xlu0 %745
    %v747 = vmul.f32 %v743, %v156
    %v748 = vmul.f32 %v746, %v156
    %v749 = vadd.f32 %v747, 1e-12
    %v750 = vadd.f32 %v748, 1e-12
    %v751 = vrsqrt.pop %v749
    %v752 = vmul.f32 %v751, %v749
    %v753 = vmul.f32 %v752, %v751
    %v754 = vmul.f32 0.5, %v753
    %v755 = vsub.f32 1.5, %v754
    %v756 = vmul.f32 %v751, %v755
    %vm757 = vweird.f32 %v749
    %vm758 = vweird.f32 %v751
    %vm759 = vmor %vm757, %vm758
    %v760 = vsel %vm759, %v751, %v756
    %v761 = vrsqrt.pop %v750
    %v762 = vmul.f32 %v761, %v750
    %v763 = vmul.f32 %v762, %v761
    %v764 = vmul.f32 0.5, %v763
    %v765 = vsub.f32 1.5, %v764
    %v766 = vmul.f32 %v761, %v765
    %vm767 = vweird.f32 %v750
    %vm768 = vweird.f32 %v761
    %vm769 = vmor %vm767, %vm768
    %v770 = vsel %vm769, %v761, %v766
    %v771 = vmul.f32 %v737, %v760
    %v772 = vmul.f32 %v738, %v770
    %v774 = vperm.slane %v727, 0
    %v776 = vmul.f32 %v771, %v774
    %v777 = vmul.f32 %v772, %v774
    %v779 = vperm.slane %v728, 0
    %v781 = vadd.f32 %v776, %v779
    %v782 = vadd.f32 %v777, %v779
    %v783 = vpack.c.bf16 %v782, %v781
    %s784 = scalar_lea.vmem %s4, 16
    %v785 = vld [vmem:[%s784] sm:$0xf]
    %v786 = vld [vmem:[%s784 + $0x4] sm:$0xf]
    %v787 = vld [vmem:[%s784 + $0x8] sm:$0xf]
    %v788 = vld [vmem:[%s784 + $0xc] sm:$0xf]
    %s789 = scalar_lea.vmem %s5, 1
    %v790 = vld [vmem:[%s789] sm:$0x1]
    %v792 = vperm.slane %v790, 0
    %v798 = vunpack.c.l.b16 %v785
    %v799 = vunpack.c.l.b16 %v786
    %v800 = vunpack.c.l.b16 %v787
    %v801 = vunpack.c.l.b16 %v788
    %v802 = vpack.c.b16 %v799, %v798
    %v803 = vpack.c.b16 %v801, %v800
    %v807 = vsel %vm143, %v783, 0
    %809 = vmatpush.bf16.msra.mxu0 0
    %810 = vmatpush.bf16.msra.mxu0 0
    %811 = vmatpush.bf16.msra.mxu0 0
    %812 = vmatpush.bf16.msra.mxu0 0
    %813 = vmatpush.bf16.msra.mxu0 0
    %814 = vmatpush.bf16.msra.mxu0 0
    %815 = vmatpush.bf16.msra.mxu0 %v803
    %816 = vmatpush.bf16.msra.mxu0 %v802
    %817 = vmatmul.bf16.gmra.mxu0 %v807
    %v818 = vpop.f32.mrf.mxu0
    %v819 = vadd.f32 %v792, %v818
    %v820 = vpop.f32.mrf.mxu0
    %v821 = vadd.f32 %v792, %v820
    %822 = vdwg.mxu0
    %825 = vrot.lane.b32.xlu0 %v819, 120
    %v826 = vpop.permute.xlu0 %825
    %827 = vrot.lane.b32.xlu0 %v821, 120
    %v828 = vpop.permute.xlu0 %827
    %831 = vrot.lane.b32.xlu0 %v819, 112
    %v832 = vpop.permute.xlu0 %831
    %833 = vrot.lane.b32.xlu0 %v821, 112
    %v834 = vpop.permute.xlu0 %833
    %837 = vrot.lane.b32.xlu0 %v819, 104
    %v838 = vpop.permute.xlu0 %837
    %839 = vrot.lane.b32.xlu0 %v821, 104
    %v840 = vpop.permute.xlu0 %839
    %v843 = vpack.c.bf16 %v821, %v819
    %v844 = vpack.c.bf16 %v828, %v826
    %v845 = vpack.c.bf16 %v834, %v832
    %v846 = vpack.c.bf16 %v840, %v838
    %851 = vrot.lane.b32.xlu0 %v843, 96
    %v852 = vpop.permute.xlu0 %851
    %853 = vrot.lane.b32.xlu0 %v844, 96
    %v854 = vpop.permute.xlu0 %853
    %855 = vrot.lane.b32.xlu0 %v845, 96
    %v856 = vpop.permute.xlu0 %855
    %857 = vrot.lane.b32.xlu0 %v846, 96
    %v858 = vpop.permute.xlu0 %857
    %v860 = vsel %vm287, %v843, 0
    %v863 = vsel %vm287, %v844, 0
    %v866 = vsel %vm287, %v845, 0
    %v869 = vsel %vm287, %v846, 0
    %v872 = vsel %vm287, %v852, 0
    %v875 = vsel %vm287, %v854, 0
    %v878 = vsel %vm287, %v856, 0
    %v881 = vsel %vm287, %v858, 0
    %883 = vmatpush.bf16.xpose.msra.mxu0 0
    %884 = vmatpush.bf16.xpose.msra.mxu0 0
    %885 = vmatpush.bf16.xpose.msra.mxu0 0
    %886 = vmatpush.bf16.xpose.msra.mxu0 0
    %887 = vmatpush.bf16.xpose.msra.mxu0 %v881
    %888 = vmatpush.bf16.xpose.msra.mxu0 %v878
    %889 = vmatpush.bf16.xpose.msra.mxu0 %v875
    %890 = vmatpush.bf16.xpose.msra.mxu0 %v872
    %891 = vmatmul.bf16.gmra.mxu0 %v860
    %v892 = vpop.f32.mrf.mxu0
    %v893 = vadd.f32 %v205, %v892
    %v894 = vpop.f32.mrf.mxu0
    %v895 = vadd.f32 %v206, %v894
    %896 = vmatmul.bf16.gmra.mxu0 %v863
    %v897 = vpop.f32.mrf.mxu0
    %v898 = vadd.f32 %v207, %v897
    %v899 = vpop.f32.mrf.mxu0
    %v900 = vadd.f32 %v208, %v899
    %901 = vmatmul.bf16.gmra.mxu0 %v866
    %v902 = vpop.f32.mrf.mxu0
    %v903 = vadd.f32 %v209, %v902
    %v904 = vpop.f32.mrf.mxu0
    %v905 = vadd.f32 %v210, %v904
    %906 = vmatmul.bf16.gmra.mxu0 %v869
    %v907 = vpop.f32.mrf.mxu0
    %v908 = vadd.f32 %v211, %v907
    %v909 = vpop.f32.mrf.mxu0
    %v910 = vadd.f32 %v212, %v909
    %911 = vdwg.mxu0
    %v912 = vsel %vm341, %v893, -inf
    %913 = vmax.xlane.f32.xlu0 %v912
    %v914 = vpop.xlane.xlu0 %913
    %v915 = vsel %vm341, %v895, -inf
    %916 = vmax.xlane.f32.xlu0 %v915
    %v917 = vpop.xlane.xlu0 %916
    %v918 = vsel %vm341, %v898, -inf
    %919 = vmax.xlane.f32.xlu0 %v918
    %v920 = vpop.xlane.xlu0 %919
    %v921 = vsel %vm341, %v900, -inf
    %922 = vmax.xlane.f32.xlu0 %v921
    %v923 = vpop.xlane.xlu0 %922
    %v924 = vsel %vm341, %v903, -inf
    %925 = vmax.xlane.f32.xlu0 %v924
    %v926 = vpop.xlane.xlu0 %925
    %v927 = vsel %vm341, %v905, -inf
    %928 = vmax.xlane.f32.xlu0 %v927
    %v929 = vpop.xlane.xlu0 %928
    %v930 = vsel %vm341, %v908, -inf
    %931 = vmax.xlane.f32.xlu0 %v930
    %v932 = vpop.xlane.xlu0 %931
    %v933 = vsel %vm341, %v910, -inf
    %934 = vmax.xlane.f32.xlu0 %v933
    %v935 = vpop.xlane.xlu0 %934
    %v936 = vsub.f32 %v893, %v914
    %v937 = vsub.f32 %v895, %v917
    %v938 = vsub.f32 %v898, %v920
    %v939 = vsub.f32 %v900, %v923
    %v940 = vsub.f32 %v903, %v926
    %v941 = vsub.f32 %v905, %v929
    %v942 = vsub.f32 %v908, %v932
    %v943 = vsub.f32 %v910, %v935
    %v944 = vmul.f32 %v936, 1.442695
    %v945 = vpow.pop %v944
    %v946 = vmul.f32 %v937, 1.442695
    %v947 = vpow.pop %v946
    %v948 = vmul.f32 %v938, 1.442695
    %v949 = vpow.pop %v948
    %v950 = vmul.f32 %v939, 1.442695
    %v951 = vpow.pop %v950
    %v952 = vmul.f32 %v940, 1.442695
    %v953 = vpow.pop %v952
    %v954 = vmul.f32 %v941, 1.442695
    %v955 = vpow.pop %v954
    %v956 = vmul.f32 %v942, 1.442695
    %v957 = vpow.pop %v956
    %v958 = vmul.f32 %v943, 1.442695
    %v959 = vpow.pop %v958
    %v960 = vsel %vm341, %v945, 0.0
    %961 = vadd.xlane.f32.xlu0 %v960
    %v962 = vpop.xlane.xlu0 %961
    %v963 = vsel %vm341, %v947, 0.0
    %964 = vadd.xlane.f32.xlu0 %v963
    %v965 = vpop.xlane.xlu0 %964
    %v966 = vsel %vm341, %v949, 0.0
    %967 = vadd.xlane.f32.xlu0 %v966
    %v968 = vpop.xlane.xlu0 %967
    %v969 = vsel %vm341, %v951, 0.0
    %970 = vadd.xlane.f32.xlu0 %v969
    %v971 = vpop.xlane.xlu0 %970
    %v972 = vsel %vm341, %v953, 0.0
    %973 = vadd.xlane.f32.xlu0 %v972
    %v974 = vpop.xlane.xlu0 %973
    %v975 = vsel %vm341, %v955, 0.0
    %976 = vadd.xlane.f32.xlu0 %v975
    %v977 = vpop.xlane.xlu0 %976
    %v978 = vsel %vm341, %v957, 0.0
    %979 = vadd.xlane.f32.xlu0 %v978
    %v980 = vpop.xlane.xlu0 %979
    %v981 = vsel %vm341, %v959, 0.0
    %982 = vadd.xlane.f32.xlu0 %v981
    %v983 = vpop.xlane.xlu0 %982
    %v984 = vrcp.pop %v962
    %v985 = vrcp.pop %v965
    %v986 = vrcp.pop %v968
    %v987 = vrcp.pop %v971
    %v988 = vrcp.pop %v974
    %v989 = vrcp.pop %v977
    %v990 = vrcp.pop %v980
    %v991 = vrcp.pop %v983
    %v992 = vmul.f32 %v945, %v984
    %v993 = vmul.f32 %v947, %v985
    %v994 = vmul.f32 %v949, %v986
    %v995 = vmul.f32 %v951, %v987
    %v996 = vmul.f32 %v953, %v988
    %v997 = vmul.f32 %v955, %v989
    %v998 = vmul.f32 %v957, %v990
    %v999 = vmul.f32 %v959, %v991
    %v1000 = vpack.c.bf16 %v993, %v992
    %v1001 = vpack.c.bf16 %v995, %v994
    %v1002 = vpack.c.bf16 %v997, %v996
    %v1003 = vpack.c.bf16 %v999, %v998
    %1004 = vrot.lane.b32.xlu0 %v843, 64
    %v1005 = vpop.permute.xlu0 %1004
    %1006 = vrot.lane.b32.xlu0 %v844, 64
    %v1007 = vpop.permute.xlu0 %1006
    %1008 = vrot.lane.b32.xlu0 %v845, 64
    %v1009 = vpop.permute.xlu0 %1008
    %1010 = vrot.lane.b32.xlu0 %v846, 64
    %v1011 = vpop.permute.xlu0 %1010
    %v1017 = vsel %vm341, %v1000, 0
    %v1020 = vsel %vm341, %v1001, 0
    %v1023 = vsel %vm341, %v1002, 0
    %v1026 = vsel %vm341, %v1003, 0
    %1028 = vmatpush.bf16.msra.mxu0 0
    %1029 = vmatpush.bf16.msra.mxu0 0
    %1030 = vmatpush.bf16.msra.mxu0 0
    %1031 = vmatpush.bf16.msra.mxu0 0
    %1032 = vmatpush.bf16.msra.mxu0 %v1011
    %1033 = vmatpush.bf16.msra.mxu0 %v1009
    %1034 = vmatpush.bf16.msra.mxu0 %v1007
    %1035 = vmatpush.bf16.msra.mxu0 %v1005
    %1036 = vmatmul.bf16.gmra.mxu0 %v1017
    %v1037 = vpop.f32.mrf.mxu0
    %v1038 = vadd.f32 0.0, %v1037
    %v1039 = vpop.f32.mrf.mxu0
    %v1040 = vadd.f32 0.0, %v1039
    %1041 = vmatmul.bf16.gmra.mxu0 %v1020
    %v1042 = vpop.f32.mrf.mxu0
    %v1043 = vadd.f32 0.0, %v1042
    %v1044 = vpop.f32.mrf.mxu0
    %v1045 = vadd.f32 0.0, %v1044
    %1046 = vmatmul.bf16.gmra.mxu0 %v1023
    %v1047 = vpop.f32.mrf.mxu0
    %v1048 = vadd.f32 0.0, %v1047
    %v1049 = vpop.f32.mrf.mxu0
    %v1050 = vadd.f32 0.0, %v1049
    %1051 = vmatmul.bf16.gmra.mxu0 %v1026
    %v1052 = vpop.f32.mrf.mxu0
    %v1053 = vadd.f32 0.0, %v1052
    %v1054 = vpop.f32.mrf.mxu0
    %v1055 = vadd.f32 0.0, %v1054
    %1056 = vdwg.mxu0
    %1059 = vrot.lane.b32.xlu0 %v1043, 8
    %v1060 = vpop.permute.xlu0 %1059
    %1061 = vrot.lane.b32.xlu0 %v1045, 8
    %v1062 = vpop.permute.xlu0 %1061
    %1067 = vrot.lane.b32.xlu0 %v1048, 16
    %v1068 = vpop.permute.xlu0 %1067
    %1069 = vrot.lane.b32.xlu0 %v1050, 16
    %v1070 = vpop.permute.xlu0 %1069
    %1075 = vrot.lane.b32.xlu0 %v1053, 24
    %v1076 = vpop.permute.xlu0 %1075
    %1077 = vrot.lane.b32.xlu0 %v1055, 24
    %v1078 = vpop.permute.xlu0 %1077
    %v1081 = vsel %vm287, %v1038, %v1060
    %v1082 = vsel %vm287, %v1040, %v1062
    %v1083 = vsel %vm513, %v1081, %v1068
    %v1084 = vsel %vm513, %v1082, %v1070
    %v1085 = vsel %vm516, %v1083, %v1076
    %v1086 = vsel %vm516, %v1084, %v1078
    %v1087 = vpack.c.bf16 %v1086, %v1085
    %s1088 = scalar_lea.vmem [#allocation8], 16
    %v1089 = vld [vmem:[%s1088] sm:$0xf]
    %v1090 = vld [vmem:[%s1088 + $0x4] sm:$0xf]
    %v1091 = vld [vmem:[%s1088 + $0x8] sm:$0xf]
    %v1092 = vld [vmem:[%s1088 + $0xc] sm:$0xf]
    %s1093 = scalar_lea.vmem %s7, 1
    %v1094 = vld [vmem:[%s1093] sm:$0x1]
    %v1096 = vperm.slane %v1094, 0
    %v1102 = vunpack.c.l.b16 %v1089
    %v1103 = vunpack.c.l.b16 %v1090
    %v1104 = vunpack.c.l.b16 %v1091
    %v1105 = vunpack.c.l.b16 %v1092
    %v1106 = vpack.c.b16 %v1103, %v1102
    %v1107 = vpack.c.b16 %v1105, %v1104
    %v1111 = vsel %vm143, %v1087, 0
    %1113 = vmatpush.bf16.msra.mxu0 0
    %1114 = vmatpush.bf16.msra.mxu0 0
    %1115 = vmatpush.bf16.msra.mxu0 0
    %1116 = vmatpush.bf16.msra.mxu0 0
    %1117 = vmatpush.bf16.msra.mxu0 0
    %1118 = vmatpush.bf16.msra.mxu0 0
    %1119 = vmatpush.bf16.msra.mxu0 %v1107
    %1120 = vmatpush.bf16.msra.mxu0 %v1106
    %1121 = vmatmul.bf16.gmra.mxu0 %v1111
    %v1122 = vpop.f32.mrf.mxu0
    %v1123 = vadd.f32 %v1096, %v1122
    %v1124 = vpop.f32.mrf.mxu0
    %v1125 = vadd.f32 %v1096, %v1124
    %1126 = vdwg.mxu0
    %v1127 = vadd.f32 %v1123, %v781
    %v1128 = vadd.f32 %v1125, %v782
    %s1129 = scalar_lea.vmem %s8, 1
    %v1130 = vld [vmem:[%s1129] sm:$0x1]
    %s1131 = scalar_lea.vmem %s9, 1
    %v1132 = vld [vmem:[%s1131] sm:$0x1]
    %v1133 = vsel %vm143, %v1127, 0.0
    %1134 = vadd.xlane.f32.xlu0 %v1133
    %v1135 = vpop.xlane.xlu0 %1134
    %v1136 = vsel %vm143, %v1128, 0.0
    %1137 = vadd.xlane.f32.xlu0 %v1136
    %v1138 = vpop.xlane.xlu0 %1137
    %v1139 = vmul.f32 %v1135, %v156
    %v1140 = vmul.f32 %v1138, %v156
    %v1141 = vsub.f32 %v1127, %v1139
    %v1142 = vsub.f32 %v1128, %v1140
    %v1143 = vmul.f32 %v1141, %v1141
    %v1144 = vmul.f32 %v1142, %v1142
    %v1145 = vsel %vm143, %v1143, 0.0
    %1146 = vadd.xlane.f32.xlu0 %v1145
    %v1147 = vpop.xlane.xlu0 %1146
    %v1148 = vsel %vm143, %v1144, 0.0
    %1149 = vadd.xlane.f32.xlu0 %v1148
    %v1150 = vpop.xlane.xlu0 %1149
    %v1151 = vmul.f32 %v1147, %v156
    %v1152 = vmul.f32 %v1150, %v156
    %v1153 = vadd.f32 %v1151, 1e-12
    %v1154 = vadd.f32 %v1152, 1e-12
    %v1155 = vrsqrt.pop %v1153
    %v1156 = vmul.f32 %v1155, %v1153
    %v1157 = vmul.f32 %v1156, %v1155
    %v1158 = vmul.f32 0.5, %v1157
    %v1159 = vsub.f32 1.5, %v1158
    %v1160 = vmul.f32 %v1155, %v1159
    %vm1161 = vweird.f32 %v1153
    %vm1162 = vweird.f32 %v1155
    %vm1163 = vmor %vm1161, %vm1162
    %v1164 = vsel %vm1163, %v1155, %v1160
    %v1165 = vrsqrt.pop %v1154
    %v1166 = vmul.f32 %v1165, %v1154
    %v1167 = vmul.f32 %v1166, %v1165
    %v1168 = vmul.f32 0.5, %v1167
    %v1169 = vsub.f32 1.5, %v1168
    %v1170 = vmul.f32 %v1165, %v1169
    %vm1171 = vweird.f32 %v1154
    %vm1172 = vweird.f32 %v1165
    %vm1173 = vmor %vm1171, %vm1172
    %v1174 = vsel %vm1173, %v1165, %v1170
    %v1175 = vmul.f32 %v1141, %v1164
    %v1176 = vmul.f32 %v1142, %v1174
    %v1178 = vperm.slane %v1130, 0
    %v1180 = vmul.f32 %v1175, %v1178
    %v1181 = vmul.f32 %v1176, %v1178
    %v1183 = vperm.slane %v1132, 0
    %v1185 = vadd.f32 %v1180, %v1183
    %v1186 = vadd.f32 %v1181, %v1183
    %v1187 = vpack.c.bf16 %v1186, %v1185
    %s1188 = scalar_lea.vmem [#allocation9], 16
    %v1189 = vld [vmem:[%s1188] sm:$0xf]
    %v1190 = vld [vmem:[%s1188 + $0x4] sm:$0xf]
    %v1191 = vld [vmem:[%s1188 + $0x8] sm:$0xf]
    %v1192 = vld [vmem:[%s1188 + $0xc] sm:$0xf]
    %s1193 = scalar_lea.vmem %s11, 1
    %v1194 = vld [vmem:[%s1193] sm:$0x1]
    %v1196 = vperm.slane %v1194, 0
    %v1202 = vunpack.c.l.b16 %v1189
    %v1203 = vunpack.c.l.b16 %v1190
    %v1204 = vunpack.c.l.b16 %v1191
    %v1205 = vunpack.c.l.b16 %v1192
    %v1206 = vpack.c.b16 %v1203, %v1202
    %v1207 = vpack.c.b16 %v1205, %v1204
    %v1211 = vsel %vm143, %v1187, 0
    %1213 = vmatpush.bf16.msra.mxu0 0
    %1214 = vmatpush.bf16.msra.mxu0 0
    %1215 = vmatpush.bf16.msra.mxu0 0
    %1216 = vmatpush.bf16.msra.mxu0 0
    %1217 = vmatpush.bf16.msra.mxu0 0
    %1218 = vmatpush.bf16.msra.mxu0 0
    %1219 = vmatpush.bf16.msra.mxu0 %v1207
    %1220 = vmatpush.bf16.msra.mxu0 %v1206
    %1221 = vmatmul.bf16.gmra.mxu0 %v1211
    %v1222 = vpop.f32.mrf.mxu0
    %v1223 = vadd.f32 %v1196, %v1222
    %v1224 = vpop.f32.mrf.mxu0
    %v1225 = vadd.f32 %v1196, %v1224
    %1226 = vdwg.mxu0
    %v1227 = vmul.f32 %v1223, %v1223
    %v1228 = vmul.f32 %v1225, %v1225
    %v1229 = vmul.f32 %v1223, %v1227
    %v1230 = vmul.f32 %v1225, %v1228
    %v1231 = vmul.f32 %v1229, 0.044715
    %v1232 = vmul.f32 %v1230, 0.044715
    %v1233 = vadd.f32 %v1223, %v1231
    %v1234 = vadd.f32 %v1225, %v1232
    %v1235 = vmul.f32 %v1233, 0.7978846
    %v1236 = vmul.f32 %v1234, 0.7978846
    %v1237 = vtanh.pop %v1235
    %v1238 = vtanh.pop %v1236
    %v1239 = vadd.f32 %v1237, 1.0
    %v1240 = vadd.f32 %v1238, 1.0
    %v1241 = vmul.f32 %v1239, 0.5
    %v1242 = vmul.f32 %v1240, 0.5
    %v1243 = vmul.f32 %v1223, %v1241
    %v1244 = vmul.f32 %v1225, %v1242
    %v1245 = vpack.c.bf16 %v1244, %v1243
    %s1246 = scalar_lea.vmem %s12, 32
    %v1247 = vld [vmem:[%s1246] sm:$0xf]
    %v1248 = vld [vmem:[%s1246 + $0x4] sm:$0xf]
    %v1249 = vld [vmem:[%s1246 + $0x8] sm:$0xf]
    %v1250 = vld [vmem:[%s1246 + $0xc] sm:$0xf]
    %v1251 = vld [vmem:[%s1246 + $0x10] sm:$0xf]
    %v1252 = vld [vmem:[%s1246 + $0x14] sm:$0xf]
    %v1253 = vld [vmem:[%s1246 + $0x18] sm:$0xf]
    %v1254 = vld [vmem:[%s1246 + $0x1c] sm:$0xf]
    %s1255 = scalar_lea.vmem %s13, 1
    %v1256 = vld [vmem:[%s1255] sm:$0x1]
    %v1258 = vperm.slane %v1256, 0
    %v1268 = vunpack.c.l.b16 %v1247
    %v1269 = vunpack.c.l.b16 %v1248
    %v1270 = vunpack.c.l.b16 %v1249
    %v1271 = vunpack.c.l.b16 %v1250
    %v1272 = vunpack.c.l.b16 %v1251
    %v1273 = vunpack.c.l.b16 %v1252
    %v1274 = vunpack.c.l.b16 %v1253
    %v1275 = vunpack.c.l.b16 %v1254
    %v1276 = vpack.c.b16 %v1269, %v1268
    %v1277 = vpack.c.b16 %v1271, %v1270
    %v1278 = vpack.c.b16 %v1273, %v1272
    %v1279 = vpack.c.b16 %v1275, %v1274
    %v1285 = vsel %vm341, %v1245, 0
    %1287 = vmatpush.bf16.msra.mxu0 0
    %1288 = vmatpush.bf16.msra.mxu0 0
    %1289 = vmatpush.bf16.msra.mxu0 0
    %1290 = vmatpush.bf16.msra.mxu0 0
    %1291 = vmatpush.bf16.msra.mxu0 %v1279
    %1292 = vmatpush.bf16.msra.mxu0 %v1278
    %1293 = vmatpush.bf16.msra.mxu0 %v1277
    %1294 = vmatpush.bf16.msra.mxu0 %v1276
    %1295 = vmatmul.bf16.gmra.mxu0 %v1285
    %v1296 = vpop.f32.mrf.mxu0
    %v1297 = vadd.f32 %v1258, %v1296
    %v1298 = vpop.f32.mrf.mxu0
    %v1299 = vadd.f32 %v1258, %v1298
    %1300 = vdwg.mxu0
    %v1301 = vadd.f32 %v1297, %v1185
    %v1302 = vadd.f32 %v1299, %v1186
    %s1303 = scalar_lea.vmem %s14, 1
    %v1304 = vld [vmem:[%s1303] sm:$0x1]
    %s1305 = scalar_lea.vmem [#allocation11], 1
    %v1306 = vld [vmem:[%s1305] sm:$0x1]
    %v1307 = vsel %vm143, %v1301, 0.0
    %1308 = vadd.xlane.f32.xlu0 %v1307
    %v1309 = vpop.xlane.xlu0 %1308
    %v1310 = vsel %vm143, %v1302, 0.0
    %1311 = vadd.xlane.f32.xlu0 %v1310
    %v1312 = vpop.xlane.xlu0 %1311
    %v1313 = vmul.f32 %v1309, %v156
    %v1314 = vmul.f32 %v1312, %v156
    %v1315 = vsub.f32 %v1301, %v1313
    %v1316 = vsub.f32 %v1302, %v1314
    %v1317 = vmul.f32 %v1315, %v1315
    %v1318 = vmul.f32 %v1316, %v1316
    %v1319 = vsel %vm143, %v1317, 0.0
    %1320 = vadd.xlane.f32.xlu0 %v1319
    %v1321 = vpop.xlane.xlu0 %1320
    %v1322 = vsel %vm143, %v1318, 0.0
    %1323 = vadd.xlane.f32.xlu0 %v1322
    %v1324 = vpop.xlane.xlu0 %1323
    %v1325 = vmul.f32 %v1321, %v156
    %v1326 = vmul.f32 %v1324, %v156
    %v1327 = vadd.f32 %v1325, 1e-12
    %v1328 = vadd.f32 %v1326, 1e-12
    %v1329 = vrsqrt.pop %v1327
    %v1330 = vmul.f32 %v1329, %v1327
    %v1331 = vmul.f32 %v1330, %v1329
    %v1332 = vmul.f32 0.5, %v1331
    %v1333 = vsub.f32 1.5, %v1332
    %v1334 = vmul.f32 %v1329, %v1333
    %vm1335 = vweird.f32 %v1327
    %vm1336 = vweird.f32 %v1329
    %vm1337 = vmor %vm1335, %vm1336
    %v1338 = vsel %vm1337, %v1329, %v1334
    %v1339 = vrsqrt.pop %v1328
    %v1340 = vmul.f32 %v1339, %v1328
    %v1341 = vmul.f32 %v1340, %v1339
    %v1342 = vmul.f32 0.5, %v1341
    %v1343 = vsub.f32 1.5, %v1342
    %v1344 = vmul.f32 %v1339, %v1343
    %vm1345 = vweird.f32 %v1328
    %vm1346 = vweird.f32 %v1339
    %vm1347 = vmor %vm1345, %vm1346
    %v1348 = vsel %vm1347, %v1339, %v1344
    %v1349 = vmul.f32 %v1315, %v1338
    %v1350 = vmul.f32 %v1316, %v1348
    %v1352 = vperm.slane %v1304, 0
    %v1354 = vmul.f32 %v1349, %v1352
    %v1355 = vmul.f32 %v1350, %v1352
    %v1357 = vperm.slane %v1306, 0
    %v1359 = vadd.f32 %v1354, %v1357
    %v1360 = vadd.f32 %v1355, %v1357
    %v1361 = vld [vmem:[%s16] sm:$0x1]
    %v1362 = vpack.c.bf16 %v1360, %v1359
    %v1363 = vld [vmem:[#allocation2] sm:$0x1]
    %1365 = vset.pattern.permute.xlu0 0
    %1366 = vperm.xlu0 %1365, %v1363
    %v1367 = vpop.permute.xlu0 %1366
    %v1369 = vperm.slane %v1367, 0
    %v1371 = vsel %vm143, %v1361, 0
    %v1374 = vsel %vm143, %v1362, 0
    %1376 = vmatpush.bf16.xpose.msra.mxu0 0
    %1377 = vmatpush.bf16.xpose.msra.mxu0 0
    %1378 = vmatpush.bf16.xpose.msra.mxu0 0
    %1379 = vmatpush.bf16.xpose.msra.mxu0 0
    %1380 = vmatpush.bf16.xpose.msra.mxu0 0
    %1381 = vmatpush.bf16.xpose.msra.mxu0 0
    %1382 = vmatpush.bf16.xpose.msra.mxu0 0
    %1383 = vmatpush.bf16.xpose.msra.mxu0 %v1374
    %1384 = vmatmul.bf16.gmra.mxu0 %v1371
    %v1385 = vpop.f32.mrf.mxu0
    %v1386 = vadd.f32 %v1369, %v1385
    %v1387 = vpop.f32.mrf.mxu0
    %1388 = vdwg.mxu0
    %v1389 = vxor.u32 %v1386, 2147483648
    %v1390 = vmul.f32 %v1389, 1.442695
    %v1391 = vpow.pop %v1390
    %v1392 = vadd.f32 %v1391, 1.0
    %v1393 = vrcp.pop %v1392
    %v1394 = vmul.f32 %v1392, %v1393
    %v1395 = vsub.f32 1.0, %v1394
    %v1396 = vmul.f32 %v1393, %v1395
    %v1397 = vadd.f32 %v1393, %v1396
    %vm1398 = vweird.f32 %v1392
    %vm1399 = vweird.f32 %v1393
    %vm1400 = vmor %vm1398, %vm1399
    %v1401 = vsel %vm1400, %v1393, %v1397
    %v1402 = vand.u32 2147483647, %v1392
    %vm1403 = vcmp.eq.f32.partialorder %v1402, 8.507059e+37
    %v1404 = vand.u32 %v1392, 2147483648
    %v1405 = vor.u32 1.1754944e-38, %v1404
    %v1406 = vsel %vm1403, %v1405, %v1401
    %v1407 = vmul.f32 1.0, %v1406
    %vm1408 = vcmask 122880
    %1409 = vst.msk [vmem:[#allocation12] sm:$0x1] %vm1408, %v1407
    // Predicated region
    $region94: #{tpu_custom_call.1} parent=1 // pred_check
      _
    $region95: #{tpu_custom_call.1} parent=1 // pred_check_branch
      %1411 = sbr.rel (0) target = $region97
    $region96: #{tpu_custom_call.1} parent=1 // pred_region
      %1413 = vsyncadd [#allocation5], 0
      %s1415 = sshll.u32 [#allocation12], 4
      %s1416 = int_to_ptr.vmem [resolvable:$true] %s1415
      %s1417 = sshll.u32 %s18, 4
      %s1418 = int_to_ptr.hbm [resolvable:$true] %s1417
      %1420 = dma.vmem_to_hbm [thread:$0]  %s1416, 16, %s1418, [#allocation5]
    $region97: #{tpu_custom_call.1} parent=1 // pred_fallthru
      _
    // Predicated region
    $region98: #{tpu_custom_call.1} parent=1 // pred_check
      _
    $region99: #{tpu_custom_call.1} parent=1 // pred_check_branch
      %1422 = sbr.rel (0) target = $region101
    $region100: #{tpu_custom_call.1} parent=1 // pred_region
      %1424 = dma.done [#allocation5], 16
    $region101: #{tpu_custom_call.1} parent=1 // pred_fallthru
      _
    %1425 = vsyncpa [#allocation4], 1
    %1426 = vsyncpa [#allocation7], 1
    %1427 = vsyncpa [#allocation10], 1
    %1428 = vsyncpa [#allocation5], 1

</llo_original>
